<compile_context>
chip_gen: v7x
topology: tpu7x:2x2x1
jax: 0.10.0
libtpu: 0.0.40
codegen_flags: <defaults>
</compile_context>

<pallas_src>
import numpy as np
import jax
import jax.numpy as jnp
from jax.experimental import pallas as pl
from jax.experimental.pallas import tpu as pltpu

BN_EPS = 1e-5


def _fub_kernel(x_ref, p1_ref, p2_ref, out_ref, s_ref):
    """One grid step = one batch shard; all nodes / pairs handled in-kernel.

    x_ref / out_ref : (N, Bs, C, HW)
    p1_ref          : (2*Cr, C+1)    [[wl1 | bl1], [wg1 | bg1]]   (BN folded)
    p2_ref          : (2*C, 2*Cr+1)  [[wl2, 0 | bl2], [0, wg2 | bg2]]
    s_ref           : VMEM scratch (C, P*Bs*HW + gap_pad): lane-concatenated
                      pair sums + a trailing lane tile of pair-GAP columns.
    """
    N, Bs, C, HW = x_ref.shape
    Cr = p1_ref.shape[0] // 2
    pairs = [(i, j) for i in range(N) for j in range(N) if i < j]
    P = len(pairs)
    gap_off = P * Bs * HW
    gap_pad = s_ref.shape[1] - gap_off

    # ---- load node tiles; per-node/per-batch GAP (mean(xi+xj)=mean xi+mean xj)
    x = [[x_ref[n, b] for b in range(Bs)] for n in range(N)]          # (C, HW)
    gap = [[jnp.mean(x[n][b], axis=-1, keepdims=True) for b in range(Bs)]
           for n in range(N)]                                          # (C, 1)

    # ---- stage pair sums + pair-GAP columns contiguously in VMEM (matmul RHS)
    for p, (i, j) in enumerate(pairs):
        for b in range(Bs):
            off = (p * Bs + b) * HW
            s_ref[:, off:off + HW] = x[i][b] + x[j][b]
    gap_cols = [gap[i][b] + gap[j][b] for (i, j) in pairs for b in range(Bs)]
    s_ref[:, gap_off:] = jnp.concatenate(
        gap_cols + [jnp.zeros((C, gap_pad - P * Bs), jnp.float32)], axis=-1)

    # ---- both MS_CAM branches in exactly two MXU calls (bf16 ops, f32 acc)
    w1 = p1_ref[:, :C].astype(jnp.bfloat16)          # (2Cr, C)   [wl1; wg1]
    b1 = p1_ref[:, C:C + 1]                          # (2Cr, 1)   f32
    w2 = p2_ref[:, :2 * Cr].astype(jnp.bfloat16)     # (2C, 2Cr)  block-diag
    b2 = p2_ref[:, 2 * Cr:2 * Cr + 1]                # (2C, 1)    f32
    rhs = s_ref[...].astype(jnp.bfloat16)            # (C, gap_off + gap_pad)
    y = jnp.maximum(
        jnp.dot(w1, rhs, preferred_element_type=jnp.float32) + b1, 0.0)
    z = jnp.dot(w2, y.astype(jnp.bfloat16),
                preferred_element_type=jnp.float32) + b2
    xl = z[:C, :gap_off]                  # local branch, spatial cols (C, P*Bs*HW)
    xg = z[C:, gap_off:gap_off + P * Bs]  # global branch, gate cols   (C, P*Bs)

    # ---- sigmoid gate + symmetric graph fusion, never leaving VMEM:
    #      out[i] += score_ij * x[j];  out[j] += score_ij * x[i]
    acc = [[None] * Bs for _ in range(N)]
    for p, (i, j) in enumerate(pairs):
        for b in range(Bs):
            col = p * Bs + b
            off = col * HW
            wei = jax.nn.sigmoid(xl[:, off:off + HW] + xg[:, col:col + 1])  # (C, HW)
            score = s_ref[:, off:off + HW] * wei
            ti, tj = score * x[j][b], score * x[i][b]
            acc[i][b] = ti if acc[i][b] is None else acc[i][b] + ti
            acc[j][b] = tj if acc[j][b] is None else acc[j][b] + tj
    for n in range(N):
        for b in range(Bs):
            out_ref[n, b] = (acc[n][b] if acc[n][b] is not None
                             else jnp.zeros((C, HW), jnp.float32))


def _fold_bn(w, b, bn):
    """Fold an eval-mode BatchNorm2d that follows a 1x1 conv into the conv."""
    s = bn["gamma"] / jnp.sqrt(bn["var"] + BN_EPS)
    return w * s[:, None], (b - bn["mean"]) * s + bn["beta"]


def _auto_batch_shards(B):
    """v7x has 2 TensorCores/chip -> shard the batch across a size-2 'parallel'
    axis; single-TC v5e/v6e run the whole batch in one grid step."""
    try:
        kind = jax.devices()[0].device_kind.lower()
    except Exception:
        return 1
    return 2 if ("v7" in kind and B >= 2 and B % 2 == 0) else 1


def init_params(key, channels, r):
    cr = channels // r
    ks = jax.random.split(key, 8)
    w = lambda k, shape: 0.3 * jax.random.normal(k, shape, jnp.float32)
    bn = lambda c: dict(gamma=jnp.ones((c,), jnp.float32),
                        beta=jnp.zeros((c,), jnp.float32),
                        mean=jnp.zeros((c,), jnp.float32),
                        var=jnp.ones((c,), jnp.float32))
    return dict(
        wl1=w(ks[0], (cr, channels)), bl1=w(ks[1], (cr,)),
        wl2=w(ks[2], (channels, cr)), bl2=w(ks[3], (channels,)),
        wg1=w(ks[4], (cr, channels)), bg1=w(ks[5], (cr,)),
        wg2=w(ks[6], (channels, cr)), bg2=w(ks[7], (channels,)),
        bn_l1=bn(cr), bn_l2=bn(channels), bn_g1=bn(cr), bn_g2=bn(channels),
    )


def fub_forward(x, params, num_shards=None):
    """x: (node_num, B, C, H, W) float32 -> (node_num, B, C, H, W) float32."""
    N, B, C, H, W = x.shape
    HW = H * W
    Cr = params["wl1"].shape[0]
    P = N * (N - 1) // 2
    if num_shards is None:
        num_shards = _auto_batch_shards(B)
    assert B % num_shards == 0
    Bs = B // num_shards
    gap_pad = ((P * Bs + 127) // 128) * 128

    x4 = x.reshape(N, B, C, HW).astype(jnp.float32)

    # Fold eval-mode BatchNorm into the 1x1 conv weights / biases.
    wl1, bl1 = _fold_bn(params["wl1"], params["bl1"], params["bn_l1"])
    wl2, bl2 = _fold_bn(params["wl2"], params["bl2"], params["bn_l2"])
    wg1, bg1 = _fold_bn(params["wg1"], params["bg1"], params["bn_g1"])
    wg2, bg2 = _fold_bn(params["wg2"], params["bg2"], params["bn_g2"])

    # Pack layer-1 of both branches into one slab (bias as last column) and
    # layer-2 into one block-diagonal slab -> 2 weight operands instead of 8.
    p1 = jnp.concatenate([
        jnp.concatenate([wl1, bl1[:, None]], axis=1),
        jnp.concatenate([wg1, bg1[:, None]], axis=1)], axis=0)         # (2Cr, C+1)
    zblk = jnp.zeros((C, Cr), jnp.float32)
    p2 = jnp.concatenate([
        jnp.concatenate([wl2, zblk, bl2[:, None]], axis=1),
        jnp.concatenate([zblk, wg2, bg2[:, None]], axis=1)], axis=0)   # (2C, 2Cr+1)

    xspec = pl.BlockSpec((N, Bs, C, HW), lambda g: (0, g, 0, 0))
    wspec = lambda arr: pl.BlockSpec(arr.shape, lambda g: (0, 0))

    out4 = pl.pallas_call(
        _fub_kernel,
        out_shape=jax.ShapeDtypeStruct((N, B, C, HW), jnp.float32),
        grid=(num_shards,),
        in_specs=[xspec, wspec(p1), wspec(p2)],
        out_specs=xspec,
        scratch_shapes=[pltpu.VMEM((C, P * Bs * HW + gap_pad), jnp.float32)],
        compiler_params=pltpu.CompilerParams(
            dimension_semantics=("parallel",)),
    )(x4, p1, p2)

    return out4.reshape(N, B, C, H, W)


fub_forward_jit = jax.jit(fub_forward, static_argnames=("num_shards",))


# -------------------- pure-JAX reference (for validation) --------------------
def _bn_ref(v, bn):
    s = bn["gamma"] / jnp.sqrt(bn["var"] + BN_EPS)
    return ((v - bn["mean"][None, :, None, None]) * s[None, :, None, None]
            + bn["beta"][None, :, None, None])


def _ms_cam_ref(v, p):
    def conv(u, w, b):
        return jnp.einsum("oi,bihw->bohw", w, u,
                          precision=jax.lax.Precision.HIGHEST) \
               + b[None, :, None, None]

    xl = _bn_ref(conv(jax.nn.relu(_bn_ref(conv(v, p["wl1"], p["bl1"]),
                                          p["bn_l1"])),
                      p["wl2"], p["bl2"]), p["bn_l2"])
    g = jnp.mean(v, axis=(2, 3), keepdims=True)
    xg = _bn_ref(conv(jax.nn.relu(_bn_ref(conv(g, p["wg1"], p["bg1"]),
                                          p["bn_g1"])),
                      p["wg2"], p["bg2"]), p["bn_g2"])
    wei = jax.nn.sigmoid(xl + xg)
    return v * wei


def fub_reference(x, params):
    N = x.shape[0]
    rows = []
    for i in range(N):
        acc = jnp.zeros_like(x[0])
        for j in range(N):
            if i == j:
                continue
            acc = acc + _ms_cam_ref(x[i] + x[j], params) * x[j]
        rows.append(acc)
    return jnp.stack(rows, axis=0)


if __name__ == "__main__":
    # FUB(channels=8, r=4, activation=None, dropout=0.0, node_size=4)
    node_num, B, C, H, W, r = 4, 2, 8, 16, 16, 4

    key = jax.random.PRNGKey(0)
    kx, kp = jax.random.split(key)
    x = 0.5 * jax.random.normal(kx, (node_num, B, C, H, W), jnp.float32)
    params = init_params(kp, C, r)

    out = jax.block_until_ready(fub_forward_jit(x, params))
    assert out.shape == (node_num, B, C, H, W)

    ref = jax.block_until_ready(fub_reference(x, params))
    np.testing.assert_allclose(np.asarray(out), np.asarray(ref),
                               rtol=5e-2, atol=5e-2)
    print("KERNEL_OK")
</pallas_src>

<mosaic_0001>
module attributes {stable_mosaic.version = 11 : i64} {
  func.func @_fub_kernel(%arg0: i32, %arg1: memref<4x2x8x256xf32, #tpu.memory_space<vmem>>, %arg2: memref<4x9xf32, #tpu.memory_space<vmem>>, %arg3: memref<16x5xf32, #tpu.memory_space<vmem>>, %arg4: memref<4x2x8x256xf32, #tpu.memory_space<vmem>>, %arg5: memref<8x3200xf32, #tpu.memory_space<vmem>>) attributes {dimension_semantics = [#tpu.dimension_semantics<parallel>], iteration_bounds = array<i64: 1>, scalar_prefetch = 0 : i64, scratch_operands = 1 : i64, tpu.core_type = #tpu.core_type<tc>, window_params = [{transform_indices = @transform_0, window_bounds = array<i64: 4, 2, 8, 256>}, {pipeline_mode = #tpu.pipeline_mode<synchronous>, transform_indices = @transform_1, window_bounds = array<i64: 4, 9>}, {pipeline_mode = #tpu.pipeline_mode<synchronous>, transform_indices = @transform_2, window_bounds = array<i64: 16, 5>}, {transform_indices = @transform_3, window_bounds = array<i64: 4, 2, 8, 256>}]} {
    %c0 = arith.constant 0 : index
    %c0_0 = arith.constant 0 : index
    %c0_1 = arith.constant 0 : index
    %c0_2 = arith.constant 0 : index
    %0 = vector.load %arg1[%c0, %c0_0, %c0_1, %c0_2] : memref<4x2x8x256xf32, #tpu.memory_space<vmem>>, vector<1x1x8x256xf32>
    %1 = vector.shape_cast %0 : vector<1x1x8x256xf32> to vector<8x256xf32>
    %c0_3 = arith.constant 0 : index
    %c1 = arith.constant 1 : index
    %c0_4 = arith.constant 0 : index
    %c0_5 = arith.constant 0 : index
    %2 = vector.load %arg1[%c0_3, %c1, %c0_4, %c0_5] : memref<4x2x8x256xf32, #tpu.memory_space<vmem>>, vector<1x1x8x256xf32>
    %3 = vector.shape_cast %2 : vector<1x1x8x256xf32> to vector<8x256xf32>
    %c1_6 = arith.constant 1 : index
    %c0_7 = arith.constant 0 : index
    %c0_8 = arith.constant 0 : index
    %c0_9 = arith.constant 0 : index
    %4 = vector.load %arg1[%c1_6, %c0_7, %c0_8, %c0_9] : memref<4x2x8x256xf32, #tpu.memory_space<vmem>>, vector<1x1x8x256xf32>
    %5 = vector.shape_cast %4 : vector<1x1x8x256xf32> to vector<8x256xf32>
    %c1_10 = arith.constant 1 : index
    %c1_11 = arith.constant 1 : index
    %c0_12 = arith.constant 0 : index
    %c0_13 = arith.constant 0 : index
    %6 = vector.load %arg1[%c1_10, %c1_11, %c0_12, %c0_13] : memref<4x2x8x256xf32, #tpu.memory_space<vmem>>, vector<1x1x8x256xf32>
    %7 = vector.shape_cast %6 : vector<1x1x8x256xf32> to vector<8x256xf32>
    %c2 = arith.constant 2 : index
    %c0_14 = arith.constant 0 : index
    %c0_15 = arith.constant 0 : index
    %c0_16 = arith.constant 0 : index
    %8 = vector.load %arg1[%c2, %c0_14, %c0_15, %c0_16] : memref<4x2x8x256xf32, #tpu.memory_space<vmem>>, vector<1x1x8x256xf32>
    %9 = vector.shape_cast %8 : vector<1x1x8x256xf32> to vector<8x256xf32>
    %c2_17 = arith.constant 2 : index
    %c1_18 = arith.constant 1 : index
    %c0_19 = arith.constant 0 : index
    %c0_20 = arith.constant 0 : index
    %10 = vector.load %arg1[%c2_17, %c1_18, %c0_19, %c0_20] : memref<4x2x8x256xf32, #tpu.memory_space<vmem>>, vector<1x1x8x256xf32>
    %11 = vector.shape_cast %10 : vector<1x1x8x256xf32> to vector<8x256xf32>
    %c3 = arith.constant 3 : index
    %c0_21 = arith.constant 0 : index
    %c0_22 = arith.constant 0 : index
    %c0_23 = arith.constant 0 : index
    %12 = vector.load %arg1[%c3, %c0_21, %c0_22, %c0_23] : memref<4x2x8x256xf32, #tpu.memory_space<vmem>>, vector<1x1x8x256xf32>
    %13 = vector.shape_cast %12 : vector<1x1x8x256xf32> to vector<8x256xf32>
    %c3_24 = arith.constant 3 : index
    %c1_25 = arith.constant 1 : index
    %c0_26 = arith.constant 0 : index
    %c0_27 = arith.constant 0 : index
    %14 = vector.load %arg1[%c3_24, %c1_25, %c0_26, %c0_27] : memref<4x2x8x256xf32, #tpu.memory_space<vmem>>, vector<1x1x8x256xf32>
    %15 = vector.shape_cast %14 : vector<1x1x8x256xf32> to vector<8x256xf32>
    %cst = arith.constant dense<0.000000e+00> : vector<8xf32>
    %16 = vector.multi_reduction <add>, %1, %cst [1] : vector<8x256xf32> to vector<8xf32>
    %17 = vector.shape_cast %16 : vector<8xf32> to vector<8x1xf32>
    %cst_28 = arith.constant 2.560000e+02 : f32
    %18 = vector.broadcast %cst_28 : f32 to vector<8x1xf32>
    %19 = arith.divf %17, %18 : vector<8x1xf32>
    %cst_29 = arith.constant dense<0.000000e+00> : vector<8xf32>
    %20 = vector.multi_reduction <add>, %3, %cst_29 [1] : vector<8x256xf32> to vector<8xf32>
    %21 = vector.shape_cast %20 : vector<8xf32> to vector<8x1xf32>
    %cst_30 = arith.constant 2.560000e+02 : f32
    %22 = vector.broadcast %cst_30 : f32 to vector<8x1xf32>
    %23 = arith.divf %21, %22 : vector<8x1xf32>
    %cst_31 = arith.constant dense<0.000000e+00> : vector<8xf32>
    %24 = vector.multi_reduction <add>, %5, %cst_31 [1] : vector<8x256xf32> to vector<8xf32>
    %25 = vector.shape_cast %24 : vector<8xf32> to vector<8x1xf32>
    %cst_32 = arith.constant 2.560000e+02 : f32
    %26 = vector.broadcast %cst_32 : f32 to vector<8x1xf32>
    %27 = arith.divf %25, %26 : vector<8x1xf32>
    %cst_33 = arith.constant dense<0.000000e+00> : vector<8xf32>
    %28 = vector.multi_reduction <add>, %7, %cst_33 [1] : vector<8x256xf32> to vector<8xf32>
    %29 = vector.shape_cast %28 : vector<8xf32> to vector<8x1xf32>
    %cst_34 = arith.constant 2.560000e+02 : f32
    %30 = vector.broadcast %cst_34 : f32 to vector<8x1xf32>
    %31 = arith.divf %29, %30 : vector<8x1xf32>
    %cst_35 = arith.constant dense<0.000000e+00> : vector<8xf32>
    %32 = vector.multi_reduction <add>, %9, %cst_35 [1] : vector<8x256xf32> to vector<8xf32>
    %33 = vector.shape_cast %32 : vector<8xf32> to vector<8x1xf32>
    %cst_36 = arith.constant 2.560000e+02 : f32
    %34 = vector.broadcast %cst_36 : f32 to vector<8x1xf32>
    %35 = arith.divf %33, %34 : vector<8x1xf32>
    %cst_37 = arith.constant dense<0.000000e+00> : vector<8xf32>
    %36 = vector.multi_reduction <add>, %11, %cst_37 [1] : vector<8x256xf32> to vector<8xf32>
    %37 = vector.shape_cast %36 : vector<8xf32> to vector<8x1xf32>
    %cst_38 = arith.constant 2.560000e+02 : f32
    %38 = vector.broadcast %cst_38 : f32 to vector<8x1xf32>
    %39 = arith.divf %37, %38 : vector<8x1xf32>
    %cst_39 = arith.constant dense<0.000000e+00> : vector<8xf32>
    %40 = vector.multi_reduction <add>, %13, %cst_39 [1] : vector<8x256xf32> to vector<8xf32>
    %41 = vector.shape_cast %40 : vector<8xf32> to vector<8x1xf32>
    %cst_40 = arith.constant 2.560000e+02 : f32
    %42 = vector.broadcast %cst_40 : f32 to vector<8x1xf32>
    %43 = arith.divf %41, %42 : vector<8x1xf32>
    %cst_41 = arith.constant dense<0.000000e+00> : vector<8xf32>
    %44 = vector.multi_reduction <add>, %15, %cst_41 [1] : vector<8x256xf32> to vector<8xf32>
    %45 = vector.shape_cast %44 : vector<8xf32> to vector<8x1xf32>
    %cst_42 = arith.constant 2.560000e+02 : f32
    %46 = vector.broadcast %cst_42 : f32 to vector<8x1xf32>
    %47 = arith.divf %45, %46 : vector<8x1xf32>
    %48 = arith.addf %1, %5 : vector<8x256xf32>
    %c0_43 = arith.constant 0 : index
    %c0_44 = arith.constant 0 : index
    %49 = vector.load %arg5[%c0_43, %c0_44] : memref<8x3200xf32, #tpu.memory_space<vmem>>, vector<8x256xf32>
    tpu.vector_store %arg5[%c0_43, %c0_44], %48 {strides = array<i32>} : memref<8x3200xf32, #tpu.memory_space<vmem>>, vector<8x256xf32>,
    %50 = arith.addf %3, %7 : vector<8x256xf32>
    %c0_45 = arith.constant 0 : index
    %c256 = arith.constant 256 : index
    %51 = vector.load %arg5[%c0_45, %c256] : memref<8x3200xf32, #tpu.memory_space<vmem>>, vector<8x256xf32>
    tpu.vector_store %arg5[%c0_45, %c256], %50 {strides = array<i32>} : memref<8x3200xf32, #tpu.memory_space<vmem>>, vector<8x256xf32>,
    %52 = arith.addf %1, %9 : vector<8x256xf32>
    %c0_46 = arith.constant 0 : index
    %c512 = arith.constant 512 : index
    %53 = vector.load %arg5[%c0_46, %c512] : memref<8x3200xf32, #tpu.memory_space<vmem>>, vector<8x256xf32>
    tpu.vector_store %arg5[%c0_46, %c512], %52 {strides = array<i32>} : memref<8x3200xf32, #tpu.memory_space<vmem>>, vector<8x256xf32>,
    %54 = arith.addf %3, %11 : vector<8x256xf32>
    %c0_47 = arith.constant 0 : index
    %c768 = arith.constant 768 : index
    %55 = vector.load %arg5[%c0_47, %c768] : memref<8x3200xf32, #tpu.memory_space<vmem>>, vector<8x256xf32>
    tpu.vector_store %arg5[%c0_47, %c768], %54 {strides = array<i32>} : memref<8x3200xf32, #tpu.memory_space<vmem>>, vector<8x256xf32>,
    %56 = arith.addf %1, %13 : vector<8x256xf32>
    %c0_48 = arith.constant 0 : index
    %c1024 = arith.constant 1024 : index
    %57 = vector.load %arg5[%c0_48, %c1024] : memref<8x3200xf32, #tpu.memory_space<vmem>>, vector<8x256xf32>
    tpu.vector_store %arg5[%c0_48, %c1024], %56 {strides = array<i32>} : memref<8x3200xf32, #tpu.memory_space<vmem>>, vector<8x256xf32>,
    %58 = arith.addf %3, %15 : vector<8x256xf32>
    %c0_49 = arith.constant 0 : index
    %c1280 = arith.constant 1280 : index
    %59 = vector.load %arg5[%c0_49, %c1280] : memref<8x3200xf32, #tpu.memory_space<vmem>>, vector<8x256xf32>
    tpu.vector_store %arg5[%c0_49, %c1280], %58 {strides = array<i32>} : memref<8x3200xf32, #tpu.memory_space<vmem>>, vector<8x256xf32>,
    %60 = arith.addf %5, %9 : vector<8x256xf32>
    %c0_50 = arith.constant 0 : index
    %c1536 = arith.constant 1536 : index
    %61 = vector.load %arg5[%c0_50, %c1536] : memref<8x3200xf32, #tpu.memory_space<vmem>>, vector<8x256xf32>
    tpu.vector_store %arg5[%c0_50, %c1536], %60 {strides = array<i32>} : memref<8x3200xf32, #tpu.memory_space<vmem>>, vector<8x256xf32>,
    %62 = arith.addf %7, %11 : vector<8x256xf32>
    %c0_51 = arith.constant 0 : index
    %c1792 = arith.constant 1792 : index
    %63 = vector.load %arg5[%c0_51, %c1792] : memref<8x3200xf32, #tpu.memory_space<vmem>>, vector<8x256xf32>
    tpu.vector_store %arg5[%c0_51, %c1792], %62 {strides = array<i32>} : memref<8x3200xf32, #tpu.memory_space<vmem>>, vector<8x256xf32>,
    %64 = arith.addf %5, %13 : vector<8x256xf32>
    %c0_52 = arith.constant 0 : index
    %c2048 = arith.constant 2048 : index
    %65 = vector.load %arg5[%c0_52, %c2048] : memref<8x3200xf32, #tpu.memory_space<vmem>>, vector<8x256xf32>
    tpu.vector_store %arg5[%c0_52, %c2048], %64 {strides = array<i32>} : memref<8x3200xf32, #tpu.memory_space<vmem>>, vector<8x256xf32>,
    %66 = arith.addf %7, %15 : vector<8x256xf32>
    %c0_53 = arith.constant 0 : index
    %c2304 = arith.constant 2304 : index
    %67 = vector.load %arg5[%c0_53, %c2304] : memref<8x3200xf32, #tpu.memory_space<vmem>>, vector<8x256xf32>
    tpu.vector_store %arg5[%c0_53, %c2304], %66 {strides = array<i32>} : memref<8x3200xf32, #tpu.memory_space<vmem>>, vector<8x256xf32>,
    %68 = arith.addf %9, %13 : vector<8x256xf32>
    %c0_54 = arith.constant 0 : index
    %c2560 = arith.constant 2560 : index
    %69 = vector.load %arg5[%c0_54, %c2560] : memref<8x3200xf32, #tpu.memory_space<vmem>>, vector<8x256xf32>
    tpu.vector_store %arg5[%c0_54, %c2560], %68 {strides = array<i32>} : memref<8x3200xf32, #tpu.memory_space<vmem>>, vector<8x256xf32>,
    %70 = arith.addf %11, %15 : vector<8x256xf32>
    %c0_55 = arith.constant 0 : index
    %c2816 = arith.constant 2816 : index
    %71 = vector.load %arg5[%c0_55, %c2816] : memref<8x3200xf32, #tpu.memory_space<vmem>>, vector<8x256xf32>
    tpu.vector_store %arg5[%c0_55, %c2816], %70 {strides = array<i32>} : memref<8x3200xf32, #tpu.memory_space<vmem>>, vector<8x256xf32>,
    %72 = arith.addf %19, %27 : vector<8x1xf32>
    %73 = arith.addf %23, %31 : vector<8x1xf32>
    %74 = arith.addf %19, %35 : vector<8x1xf32>
    %75 = arith.addf %23, %39 : vector<8x1xf32>
    %76 = arith.addf %19, %43 : vector<8x1xf32>
    %77 = arith.addf %23, %47 : vector<8x1xf32>
    %78 = arith.addf %27, %35 : vector<8x1xf32>
    %79 = arith.addf %31, %39 : vector<8x1xf32>
    %80 = arith.addf %27, %43 : vector<8x1xf32>
    %81 = arith.addf %31, %47 : vector<8x1xf32>
    %82 = arith.addf %35, %43 : vector<8x1xf32>
    %83 = arith.addf %39, %47 : vector<8x1xf32>
    %cst_56 = arith.constant 0.000000e+00 : f32
    %84 = vector.broadcast %cst_56 : f32 to vector<8x116xf32>
    %85 = tpu.concatenate %72, %73, %74, %75, %76, %77, %78, %79, %80, %81, %82, %83, %84 in 1 : vector<8x1xf32>, vector<8x1xf32>, vector<8x1xf32>, vector<8x1xf32>, vector<8x1xf32>, vector<8x1xf32>, vector<8x1xf32>, vector<8x1xf32>, vector<8x1xf32>, vector<8x1xf32>, vector<8x1xf32>, vector<8x1xf32>, vector<8x116xf32> -> vector<8x128xf32>
    %c0_57 = arith.constant 0 : index
    %c3072 = arith.constant 3072 : index
    %86 = vector.load %arg5[%c0_57, %c3072] : memref<8x3200xf32, #tpu.memory_space<vmem>>, vector<8x128xf32>
    tpu.vector_store %arg5[%c0_57, %c3072], %85 {strides = array<i32>} : memref<8x3200xf32, #tpu.memory_space<vmem>>, vector<8x128xf32>,
    %c0_58 = arith.constant 0 : index
    %c0_59 = arith.constant 0 : index
    %87 = vector.load %arg2[%c0_58, %c0_59] : memref<4x9xf32, #tpu.memory_space<vmem>>, vector<4x8xf32>
    %88 = arith.truncf %87 : vector<4x8xf32> to vector<4x8xbf16>
    %c0_60 = arith.constant 0 : index
    %c8 = arith.constant 8 : index
    %89 = vector.load %arg2[%c0_60, %c8] : memref<4x9xf32, #tpu.memory_space<vmem>>, vector<4x1xf32>
    %c0_61 = arith.constant 0 : index
    %c0_62 = arith.constant 0 : index
    %90 = vector.load %arg3[%c0_61, %c0_62] : memref<16x5xf32, #tpu.memory_space<vmem>>, vector<16x4xf32>
    %91 = arith.truncf %90 : vector<16x4xf32> to vector<16x4xbf16>
    %c0_63 = arith.constant 0 : index
    %c4 = arith.constant 4 : index
    %92 = vector.load %arg3[%c0_63, %c4] : memref<16x5xf32, #tpu.memory_space<vmem>>, vector<16x1xf32>
    %c0_64 = arith.constant 0 : index
    %c0_65 = arith.constant 0 : index
    %93 = vector.load %arg5[%c0_64, %c0_65] : memref<8x3200xf32, #tpu.memory_space<vmem>>, vector<8x3200xf32>
    %94 = arith.truncf %93 : vector<8x3200xf32> to vector<8x3200xbf16>
    %cst_66 = arith.constant dense<0.000000e+00> : vector<4x3200xf32>
    %95 = tpu.matmul %88, %94, %cst_66 {dimension_numbers = #tpu.dot_dimension_numbers<[1], [0], [0], [1], [0, 0, 1, 1], [], []>} : vector<4x8xbf16>, vector<8x3200xbf16>, vector<4x3200xf32> -> vector<4x3200xf32>
    %96 = vector.broadcast %89 : vector<4x1xf32> to vector<4x3200xf32>
    %97 = arith.addf %95, %96 : vector<4x3200xf32>
    %cst_67 = arith.constant 0.000000e+00 : f32
    %98 = vector.broadcast %cst_67 : f32 to vector<4x3200xf32>
    %99 = arith.maximumf %97, %98 : vector<4x3200xf32>
    %100 = arith.truncf %99 : vector<4x3200xf32> to vector<4x3200xbf16>
    %cst_68 = arith.constant dense<0.000000e+00> : vector<16x3200xf32>
    %101 = tpu.matmul %91, %100, %cst_68 {dimension_numbers = #tpu.dot_dimension_numbers<[1], [0], [0], [1], [0, 0, 1, 1], [], []>} : vector<16x4xbf16>, vector<4x3200xbf16>, vector<16x3200xf32> -> vector<16x3200xf32>
    %102 = vector.broadcast %92 : vector<16x1xf32> to vector<16x3200xf32>
    %103 = arith.addf %101, %102 : vector<16x3200xf32>
    %104 = vector.extract_strided_slice %103 {offsets = [0, 0], sizes = [8, 3072], strides = [1, 1]} : vector<16x3200xf32> to vector<8x3072xf32>
    %105 = vector.extract_strided_slice %103 {offsets = [8, 3072], sizes = [8, 12], strides = [1, 1]} : vector<16x3200xf32> to vector<8x12xf32>
    %106 = vector.extract_strided_slice %104 {offsets = [0, 0], sizes = [8, 256], strides = [1, 1]} : vector<8x3072xf32> to vector<8x256xf32>
    %107 = vector.extract_strided_slice %105 {offsets = [0, 0], sizes = [8, 1], strides = [1, 1]} : vector<8x12xf32> to vector<8x1xf32>
    %108 = vector.broadcast %107 : vector<8x1xf32> to vector<8x256xf32>
    %109 = arith.addf %106, %108 : vector<8x256xf32>
    %110 = arith.negf %109 : vector<8x256xf32>
    %111 = math.exp %110 : vector<8x256xf32>
    %cst_69 = arith.constant 1.000000e+00 : f32
    %112 = vector.broadcast %cst_69 : f32 to vector<8x256xf32>
    %113 = arith.addf %112, %111 : vector<8x256xf32>
    %114 = arith.divf %112, %113 : vector<8x256xf32>
    %c0_70 = arith.constant 0 : index
    %c0_71 = arith.constant 0 : index
    %115 = vector.load %arg5[%c0_70, %c0_71] : memref<8x3200xf32, #tpu.memory_space<vmem>>, vector<8x256xf32>
    %116 = arith.mulf %115, %114 : vector<8x256xf32>
    %117 = arith.mulf %116, %5 : vector<8x256xf32>
    %118 = arith.mulf %116, %1 : vector<8x256xf32>
    %119 = vector.extract_strided_slice %104 {offsets = [0, 256], sizes = [8, 256], strides = [1, 1]} : vector<8x3072xf32> to vector<8x256xf32>
    %120 = vector.extract_strided_slice %105 {offsets = [0, 1], sizes = [8, 1], strides = [1, 1]} : vector<8x12xf32> to vector<8x1xf32>
    %121 = vector.broadcast %120 : vector<8x1xf32> to vector<8x256xf32>
    %122 = arith.addf %119, %121 : vector<8x256xf32>
    %123 = arith.negf %122 : vector<8x256xf32>
    %124 = math.exp %123 : vector<8x256xf32>
    %cst_72 = arith.constant 1.000000e+00 : f32
    %125 = vector.broadcast %cst_72 : f32 to vector<8x256xf32>
    %126 = arith.addf %125, %124 : vector<8x256xf32>
    %127 = arith.divf %125, %126 : vector<8x256xf32>
    %c0_73 = arith.constant 0 : index
    %c256_74 = arith.constant 256 : index
    %128 = vector.load %arg5[%c0_73, %c256_74] : memref<8x3200xf32, #tpu.memory_space<vmem>>, vector<8x256xf32>
    %129 = arith.mulf %128, %127 : vector<8x256xf32>
    %130 = arith.mulf %129, %7 : vector<8x256xf32>
    %131 = arith.mulf %129, %3 : vector<8x256xf32>
    %132 = vector.extract_strided_slice %104 {offsets = [0, 512], sizes = [8, 256], strides = [1, 1]} : vector<8x3072xf32> to vector<8x256xf32>
    %133 = vector.extract_strided_slice %105 {offsets = [0, 2], sizes = [8, 1], strides = [1, 1]} : vector<8x12xf32> to vector<8x1xf32>
    %134 = vector.broadcast %133 : vector<8x1xf32> to vector<8x256xf32>
    %135 = arith.addf %132, %134 : vector<8x256xf32>
    %136 = arith.negf %135 : vector<8x256xf32>
    %137 = math.exp %136 : vector<8x256xf32>
    %cst_75 = arith.constant 1.000000e+00 : f32
    %138 = vector.broadcast %cst_75 : f32 to vector<8x256xf32>
    %139 = arith.addf %138, %137 : vector<8x256xf32>
    %140 = arith.divf %138, %139 : vector<8x256xf32>
    %c0_76 = arith.constant 0 : index
    %c512_77 = arith.constant 512 : index
    %141 = vector.load %arg5[%c0_76, %c512_77] : memref<8x3200xf32, #tpu.memory_space<vmem>>, vector<8x256xf32>
    %142 = arith.mulf %141, %140 : vector<8x256xf32>
    %143 = arith.mulf %142, %9 : vector<8x256xf32>
    %144 = arith.mulf %142, %1 : vector<8x256xf32>
    %145 = arith.addf %117, %143 : vector<8x256xf32>
    %146 = vector.extract_strided_slice %104 {offsets = [0, 768], sizes = [8, 256], strides = [1, 1]} : vector<8x3072xf32> to vector<8x256xf32>
    %147 = vector.extract_strided_slice %105 {offsets = [0, 3], sizes = [8, 1], strides = [1, 1]} : vector<8x12xf32> to vector<8x1xf32>
    %148 = vector.broadcast %147 : vector<8x1xf32> to vector<8x256xf32>
    %149 = arith.addf %146, %148 : vector<8x256xf32>
    %150 = arith.negf %149 : vector<8x256xf32>
    %151 = math.exp %150 : vector<8x256xf32>
    %cst_78 = arith.constant 1.000000e+00 : f32
    %152 = vector.broadcast %cst_78 : f32 to vector<8x256xf32>
    %153 = arith.addf %152, %151 : vector<8x256xf32>
    %154 = arith.divf %152, %153 : vector<8x256xf32>
    %c0_79 = arith.constant 0 : index
    %c768_80 = arith.constant 768 : index
    %155 = vector.load %arg5[%c0_79, %c768_80] : memref<8x3200xf32, #tpu.memory_space<vmem>>, vector<8x256xf32>
    %156 = arith.mulf %155, %154 : vector<8x256xf32>
    %157 = arith.mulf %156, %11 : vector<8x256xf32>
    %158 = arith.mulf %156, %3 : vector<8x256xf32>
    %159 = arith.addf %130, %157 : vector<8x256xf32>
    %160 = vector.extract_strided_slice %104 {offsets = [0, 1024], sizes = [8, 256], strides = [1, 1]} : vector<8x3072xf32> to vector<8x256xf32>
    %161 = vector.extract_strided_slice %105 {offsets = [0, 4], sizes = [8, 1], strides = [1, 1]} : vector<8x12xf32> to vector<8x1xf32>
    %162 = vector.broadcast %161 : vector<8x1xf32> to vector<8x256xf32>
    %163 = arith.addf %160, %162 : vector<8x256xf32>
    %164 = arith.negf %163 : vector<8x256xf32>
    %165 = math.exp %164 : vector<8x256xf32>
    %cst_81 = arith.constant 1.000000e+00 : f32
    %166 = vector.broadcast %cst_81 : f32 to vector<8x256xf32>
    %167 = arith.addf %166, %165 : vector<8x256xf32>
    %168 = arith.divf %166, %167 : vector<8x256xf32>
    %c0_82 = arith.constant 0 : index
    %c1024_83 = arith.constant 1024 : index
    %169 = vector.load %arg5[%c0_82, %c1024_83] : memref<8x3200xf32, #tpu.memory_space<vmem>>, vector<8x256xf32>
    %170 = arith.mulf %169, %168 : vector<8x256xf32>
    %171 = arith.mulf %170, %13 : vector<8x256xf32>
    %172 = arith.mulf %170, %1 : vector<8x256xf32>
    %173 = arith.addf %145, %171 : vector<8x256xf32>
    %174 = vector.extract_strided_slice %104 {offsets = [0, 1280], sizes = [8, 256], strides = [1, 1]} : vector<8x3072xf32> to vector<8x256xf32>
    %175 = vector.extract_strided_slice %105 {offsets = [0, 5], sizes = [8, 1], strides = [1, 1]} : vector<8x12xf32> to vector<8x1xf32>
    %176 = vector.broadcast %175 : vector<8x1xf32> to vector<8x256xf32>
    %177 = arith.addf %174, %176 : vector<8x256xf32>
    %178 = arith.negf %177 : vector<8x256xf32>
    %179 = math.exp %178 : vector<8x256xf32>
    %cst_84 = arith.constant 1.000000e+00 : f32
    %180 = vector.broadcast %cst_84 : f32 to vector<8x256xf32>
    %181 = arith.addf %180, %179 : vector<8x256xf32>
    %182 = arith.divf %180, %181 : vector<8x256xf32>
    %c0_85 = arith.constant 0 : index
    %c1280_86 = arith.constant 1280 : index
    %183 = vector.load %arg5[%c0_85, %c1280_86] : memref<8x3200xf32, #tpu.memory_space<vmem>>, vector<8x256xf32>
    %184 = arith.mulf %183, %182 : vector<8x256xf32>
    %185 = arith.mulf %184, %15 : vector<8x256xf32>
    %186 = arith.mulf %184, %3 : vector<8x256xf32>
    %187 = arith.addf %159, %185 : vector<8x256xf32>
    %188 = vector.extract_strided_slice %104 {offsets = [0, 1536], sizes = [8, 256], strides = [1, 1]} : vector<8x3072xf32> to vector<8x256xf32>
    %189 = vector.extract_strided_slice %105 {offsets = [0, 6], sizes = [8, 1], strides = [1, 1]} : vector<8x12xf32> to vector<8x1xf32>
    %190 = vector.broadcast %189 : vector<8x1xf32> to vector<8x256xf32>
    %191 = arith.addf %188, %190 : vector<8x256xf32>
    %192 = arith.negf %191 : vector<8x256xf32>
    %193 = math.exp %192 : vector<8x256xf32>
    %cst_87 = arith.constant 1.000000e+00 : f32
    %194 = vector.broadcast %cst_87 : f32 to vector<8x256xf32>
    %195 = arith.addf %194, %193 : vector<8x256xf32>
    %196 = arith.divf %194, %195 : vector<8x256xf32>
    %c0_88 = arith.constant 0 : index
    %c1536_89 = arith.constant 1536 : index
    %197 = vector.load %arg5[%c0_88, %c1536_89] : memref<8x3200xf32, #tpu.memory_space<vmem>>, vector<8x256xf32>
    %198 = arith.mulf %197, %196 : vector<8x256xf32>
    %199 = arith.mulf %198, %9 : vector<8x256xf32>
    %200 = arith.mulf %198, %5 : vector<8x256xf32>
    %201 = arith.addf %118, %199 : vector<8x256xf32>
    %202 = arith.addf %144, %200 : vector<8x256xf32>
    %203 = vector.extract_strided_slice %104 {offsets = [0, 1792], sizes = [8, 256], strides = [1, 1]} : vector<8x3072xf32> to vector<8x256xf32>
    %204 = vector.extract_strided_slice %105 {offsets = [0, 7], sizes = [8, 1], strides = [1, 1]} : vector<8x12xf32> to vector<8x1xf32>
    %205 = vector.broadcast %204 : vector<8x1xf32> to vector<8x256xf32>
    %206 = arith.addf %203, %205 : vector<8x256xf32>
    %207 = arith.negf %206 : vector<8x256xf32>
    %208 = math.exp %207 : vector<8x256xf32>
    %cst_90 = arith.constant 1.000000e+00 : f32
    %209 = vector.broadcast %cst_90 : f32 to vector<8x256xf32>
    %210 = arith.addf %209, %208 : vector<8x256xf32>
    %211 = arith.divf %209, %210 : vector<8x256xf32>
    %c0_91 = arith.constant 0 : index
    %c1792_92 = arith.constant 1792 : index
    %212 = vector.load %arg5[%c0_91, %c1792_92] : memref<8x3200xf32, #tpu.memory_space<vmem>>, vector<8x256xf32>
    %213 = arith.mulf %212, %211 : vector<8x256xf32>
    %214 = arith.mulf %213, %11 : vector<8x256xf32>
    %215 = arith.mulf %213, %7 : vector<8x256xf32>
    %216 = arith.addf %131, %214 : vector<8x256xf32>
    %217 = arith.addf %158, %215 : vector<8x256xf32>
    %218 = vector.extract_strided_slice %104 {offsets = [0, 2048], sizes = [8, 256], strides = [1, 1]} : vector<8x3072xf32> to vector<8x256xf32>
    %219 = vector.extract_strided_slice %105 {offsets = [0, 8], sizes = [8, 1], strides = [1, 1]} : vector<8x12xf32> to vector<8x1xf32>
    %220 = vector.broadcast %219 : vector<8x1xf32> to vector<8x256xf32>
    %221 = arith.addf %218, %220 : vector<8x256xf32>
    %222 = arith.negf %221 : vector<8x256xf32>
    %223 = math.exp %222 : vector<8x256xf32>
    %cst_93 = arith.constant 1.000000e+00 : f32
    %224 = vector.broadcast %cst_93 : f32 to vector<8x256xf32>
    %225 = arith.addf %224, %223 : vector<8x256xf32>
    %226 = arith.divf %224, %225 : vector<8x256xf32>
    %c0_94 = arith.constant 0 : index
    %c2048_95 = arith.constant 2048 : index
    %227 = vector.load %arg5[%c0_94, %c2048_95] : memref<8x3200xf32, #tpu.memory_space<vmem>>, vector<8x256xf32>
    %228 = arith.mulf %227, %226 : vector<8x256xf32>
    %229 = arith.mulf %228, %13 : vector<8x256xf32>
    %230 = arith.mulf %228, %5 : vector<8x256xf32>
    %231 = arith.addf %201, %229 : vector<8x256xf32>
    %232 = arith.addf %172, %230 : vector<8x256xf32>
    %233 = vector.extract_strided_slice %104 {offsets = [0, 2304], sizes = [8, 256], strides = [1, 1]} : vector<8x3072xf32> to vector<8x256xf32>
    %234 = vector.extract_strided_slice %105 {offsets = [0, 9], sizes = [8, 1], strides = [1, 1]} : vector<8x12xf32> to vector<8x1xf32>
    %235 = vector.broadcast %234 : vector<8x1xf32> to vector<8x256xf32>
    %236 = arith.addf %233, %235 : vector<8x256xf32>
    %237 = arith.negf %236 : vector<8x256xf32>
    %238 = math.exp %237 : vector<8x256xf32>
    %cst_96 = arith.constant 1.000000e+00 : f32
    %239 = vector.broadcast %cst_96 : f32 to vector<8x256xf32>
    %240 = arith.addf %239, %238 : vector<8x256xf32>
    %241 = arith.divf %239, %240 : vector<8x256xf32>
    %c0_97 = arith.constant 0 : index
    %c2304_98 = arith.constant 2304 : index
    %242 = vector.load %arg5[%c0_97, %c2304_98] : memref<8x3200xf32, #tpu.memory_space<vmem>>, vector<8x256xf32>
    %243 = arith.mulf %242, %241 : vector<8x256xf32>
    %244 = arith.mulf %243, %15 : vector<8x256xf32>
    %245 = arith.mulf %243, %7 : vector<8x256xf32>
    %246 = arith.addf %216, %244 : vector<8x256xf32>
    %247 = arith.addf %186, %245 : vector<8x256xf32>
    %248 = vector.extract_strided_slice %104 {offsets = [0, 2560], sizes = [8, 256], strides = [1, 1]} : vector<8x3072xf32> to vector<8x256xf32>
    %249 = vector.extract_strided_slice %105 {offsets = [0, 10], sizes = [8, 1], strides = [1, 1]} : vector<8x12xf32> to vector<8x1xf32>
    %250 = vector.broadcast %249 : vector<8x1xf32> to vector<8x256xf32>
    %251 = arith.addf %248, %250 : vector<8x256xf32>
    %252 = arith.negf %251 : vector<8x256xf32>
    %253 = math.exp %252 : vector<8x256xf32>
    %cst_99 = arith.constant 1.000000e+00 : f32
    %254 = vector.broadcast %cst_99 : f32 to vector<8x256xf32>
    %255 = arith.addf %254, %253 : vector<8x256xf32>
    %256 = arith.divf %254, %255 : vector<8x256xf32>
    %c0_100 = arith.constant 0 : index
    %c2560_101 = arith.constant 2560 : index
    %257 = vector.load %arg5[%c0_100, %c2560_101] : memref<8x3200xf32, #tpu.memory_space<vmem>>, vector<8x256xf32>
    %258 = arith.mulf %257, %256 : vector<8x256xf32>
    %259 = arith.mulf %258, %13 : vector<8x256xf32>
    %260 = arith.mulf %258, %9 : vector<8x256xf32>
    %261 = arith.addf %202, %259 : vector<8x256xf32>
    %262 = arith.addf %232, %260 : vector<8x256xf32>
    %263 = vector.extract_strided_slice %104 {offsets = [0, 2816], sizes = [8, 256], strides = [1, 1]} : vector<8x3072xf32> to vector<8x256xf32>
    %264 = vector.extract_strided_slice %105 {offsets = [0, 11], sizes = [8, 1], strides = [1, 1]} : vector<8x12xf32> to vector<8x1xf32>
    %265 = vector.broadcast %264 : vector<8x1xf32> to vector<8x256xf32>
    %266 = arith.addf %263, %265 : vector<8x256xf32>
    %267 = arith.negf %266 : vector<8x256xf32>
    %268 = math.exp %267 : vector<8x256xf32>
    %cst_102 = arith.constant 1.000000e+00 : f32
    %269 = vector.broadcast %cst_102 : f32 to vector<8x256xf32>
    %270 = arith.addf %269, %268 : vector<8x256xf32>
    %271 = arith.divf %269, %270 : vector<8x256xf32>
    %c0_103 = arith.constant 0 : index
    %c2816_104 = arith.constant 2816 : index
    %272 = vector.load %arg5[%c0_103, %c2816_104] : memref<8x3200xf32, #tpu.memory_space<vmem>>, vector<8x256xf32>
    %273 = arith.mulf %272, %271 : vector<8x256xf32>
    %274 = arith.mulf %273, %15 : vector<8x256xf32>
    %275 = arith.mulf %273, %11 : vector<8x256xf32>
    %276 = arith.addf %217, %274 : vector<8x256xf32>
    %277 = arith.addf %247, %275 : vector<8x256xf32>
    %c0_105 = arith.constant 0 : index
    %c0_106 = arith.constant 0 : index
    %c0_107 = arith.constant 0 : index
    %c0_108 = arith.constant 0 : index
    %278 = vector.load %arg4[%c0_105, %c0_106, %c0_107, %c0_108] : memref<4x2x8x256xf32, #tpu.memory_space<vmem>>, vector<1x1x8x256xf32>
    %279 = vector.shape_cast %278 : vector<1x1x8x256xf32> to vector<8x256xf32>
    %280 = vector.shape_cast %173 : vector<8x256xf32> to vector<1x1x8x256xf32>
    tpu.vector_store %arg4[%c0_105, %c0_106, %c0_107, %c0_108], %280 {strides = array<i32>} : memref<4x2x8x256xf32, #tpu.memory_space<vmem>>, vector<1x1x8x256xf32>,
    %c0_109 = arith.constant 0 : index
    %c1_110 = arith.constant 1 : index
    %c0_111 = arith.constant 0 : index
    %c0_112 = arith.constant 0 : index
    %281 = vector.load %arg4[%c0_109, %c1_110, %c0_111, %c0_112] : memref<4x2x8x256xf32, #tpu.memory_space<vmem>>, vector<1x1x8x256xf32>
    %282 = vector.shape_cast %281 : vector<1x1x8x256xf32> to vector<8x256xf32>
    %283 = vector.shape_cast %187 : vector<8x256xf32> to vector<1x1x8x256xf32>
    tpu.vector_store %arg4[%c0_109, %c1_110, %c0_111, %c0_112], %283 {strides = array<i32>} : memref<4x2x8x256xf32, #tpu.memory_space<vmem>>, vector<1x1x8x256xf32>,
    %c1_113 = arith.constant 1 : index
    %c0_114 = arith.constant 0 : index
    %c0_115 = arith.constant 0 : index
    %c0_116 = arith.constant 0 : index
    %284 = vector.load %arg4[%c1_113, %c0_114, %c0_115, %c0_116] : memref<4x2x8x256xf32, #tpu.memory_space<vmem>>, vector<1x1x8x256xf32>
    %285 = vector.shape_cast %284 : vector<1x1x8x256xf32> to vector<8x256xf32>
    %286 = vector.shape_cast %231 : vector<8x256xf32> to vector<1x1x8x256xf32>
    tpu.vector_store %arg4[%c1_113, %c0_114, %c0_115, %c0_116], %286 {strides = array<i32>} : memref<4x2x8x256xf32, #tpu.memory_space<vmem>>, vector<1x1x8x256xf32>,
    %c1_117 = arith.constant 1 : index
    %c1_118 = arith.constant 1 : index
    %c0_119 = arith.constant 0 : index
    %c0_120 = arith.constant 0 : index
    %287 = vector.load %arg4[%c1_117, %c1_118, %c0_119, %c0_120] : memref<4x2x8x256xf32, #tpu.memory_space<vmem>>, vector<1x1x8x256xf32>
    %288 = vector.shape_cast %287 : vector<1x1x8x256xf32> to vector<8x256xf32>
    %289 = vector.shape_cast %246 : vector<8x256xf32> to vector<1x1x8x256xf32>
    tpu.vector_store %arg4[%c1_117, %c1_118, %c0_119, %c0_120], %289 {strides = array<i32>} : memref<4x2x8x256xf32, #tpu.memory_space<vmem>>, vector<1x1x8x256xf32>,
    %c2_121 = arith.constant 2 : index
    %c0_122 = arith.constant 0 : index
    %c0_123 = arith.constant 0 : index
    %c0_124 = arith.constant 0 : index
    %290 = vector.load %arg4[%c2_121, %c0_122, %c0_123, %c0_124] : memref<4x2x8x256xf32, #tpu.memory_space<vmem>>, vector<1x1x8x256xf32>
    %291 = vector.shape_cast %290 : vector<1x1x8x256xf32> to vector<8x256xf32>
    %292 = vector.shape_cast %261 : vector<8x256xf32> to vector<1x1x8x256xf32>
    tpu.vector_store %arg4[%c2_121, %c0_122, %c0_123, %c0_124], %292 {strides = array<i32>} : memref<4x2x8x256xf32, #tpu.memory_space<vmem>>, vector<1x1x8x256xf32>,
    %c2_125 = arith.constant 2 : index
    %c1_126 = arith.constant 1 : index
    %c0_127 = arith.constant 0 : index
    %c0_128 = arith.constant 0 : index
    %293 = vector.load %arg4[%c2_125, %c1_126, %c0_127, %c0_128] : memref<4x2x8x256xf32, #tpu.memory_space<vmem>>, vector<1x1x8x256xf32>
    %294 = vector.shape_cast %293 : vector<1x1x8x256xf32> to vector<8x256xf32>
    %295 = vector.shape_cast %276 : vector<8x256xf32> to vector<1x1x8x256xf32>
    tpu.vector_store %arg4[%c2_125, %c1_126, %c0_127, %c0_128], %295 {strides = array<i32>} : memref<4x2x8x256xf32, #tpu.memory_space<vmem>>, vector<1x1x8x256xf32>,
    %c3_129 = arith.constant 3 : index
    %c0_130 = arith.constant 0 : index
    %c0_131 = arith.constant 0 : index
    %c0_132 = arith.constant 0 : index
    %296 = vector.load %arg4[%c3_129, %c0_130, %c0_131, %c0_132] : memref<4x2x8x256xf32, #tpu.memory_space<vmem>>, vector<1x1x8x256xf32>
    %297 = vector.shape_cast %296 : vector<1x1x8x256xf32> to vector<8x256xf32>
    %298 = vector.shape_cast %262 : vector<8x256xf32> to vector<1x1x8x256xf32>
    tpu.vector_store %arg4[%c3_129, %c0_130, %c0_131, %c0_132], %298 {strides = array<i32>} : memref<4x2x8x256xf32, #tpu.memory_space<vmem>>, vector<1x1x8x256xf32>,
    %c3_133 = arith.constant 3 : index
    %c1_134 = arith.constant 1 : index
    %c0_135 = arith.constant 0 : index
    %c0_136 = arith.constant 0 : index
    %299 = vector.load %arg4[%c3_133, %c1_134, %c0_135, %c0_136] : memref<4x2x8x256xf32, #tpu.memory_space<vmem>>, vector<1x1x8x256xf32>
    %300 = vector.shape_cast %299 : vector<1x1x8x256xf32> to vector<8x256xf32>
    %301 = vector.shape_cast %277 : vector<8x256xf32> to vector<1x1x8x256xf32>
    tpu.vector_store %arg4[%c3_133, %c1_134, %c0_135, %c0_136], %301 {strides = array<i32>} : memref<4x2x8x256xf32, #tpu.memory_space<vmem>>, vector<1x1x8x256xf32>,
    return
  }
  func.func @transform_0(%arg0: i32) -> (i32, i32, i32, i32) {
    %c0_i32 = arith.constant 0 : i32
    %c0_i32_0 = arith.constant 0 : i32
    %c0_i32_1 = arith.constant 0 : i32
    %c0_i32_2 = arith.constant 0 : i32
    return %c0_i32, %arg0, %c0_i32_0, %c0_i32_1 : i32, i32, i32, i32
  }
  func.func @transform_1(%arg0: i32) -> (i32, i32) {
    %c0_i32 = arith.constant 0 : i32
    %c0_i32_0 = arith.constant 0 : i32
    %c0_i32_1 = arith.constant 0 : i32
    return %c0_i32, %c0_i32_0 : i32, i32
  }
  func.func @transform_2(%arg0: i32) -> (i32, i32) {
    %c0_i32 = arith.constant 0 : i32
    %c0_i32_0 = arith.constant 0 : i32
    %c0_i32_1 = arith.constant 0 : i32
    return %c0_i32, %c0_i32_0 : i32, i32
  }
  func.func @transform_3(%arg0: i32) -> (i32, i32, i32, i32) {
    %c0_i32 = arith.constant 0 : i32
    %c0_i32_0 = arith.constant 0 : i32
    %c0_i32_1 = arith.constant 0 : i32
    %c0_i32_2 = arith.constant 0 : i32
    return %c0_i32, %arg0, %c0_i32_0, %c0_i32_1 : i32, i32, i32, i32
  }
}

</mosaic_0001>

<llo_original>
// kernel: fub_forward.1
$region0: #{fub_forward.1}
  #allocation0 [shape = 'u32[]', space=smem, size = 0x4, offset = 0x4, fixed_abs, tag = 'smem constant byte address 0x4 - core index']
  #allocation1 [shape = 'u32[144,128]{1,0:T(1,128)}', space=vmem, size = 0x12000, scoped, tag = 'internal scratch']
  #allocation2 [shape = 'f32[8,3200]{1,0:T(8,128)}', space=vmem, size = 0x19000, scoped, tag = 'scratch operand']
  %s0 = inlined_call_operand.vmem [shape: f32[4,2,8,256], index: 0, kind: input, shape index: {}]
  %s1 = inlined_call_operand.vmem [shape: f32[4,9], index: 1, kind: input, shape index: {}]
  %s2 = inlined_call_operand.vmem [shape: f32[16,5], index: 2, kind: input, shape index: {}]
  %s3 = inlined_call_operand.vmem [shape: f32[4,2,8,256], index: 3, kind: output, shape index: {}]
  %s4 = sld [smem:[#allocation0]]
  $region22: #{fub_forward.1} parent=0
    _
  %s6 = ssub.s32 1, %s4
  %s7 = scalar_select 0, %s6, %s4
  // Predicated region
  $region2: #{fub_forward.1} parent=0 // pred_check
    _
  $region3: #{fub_forward.1} parent=0 // pred_check_branch
    %9 = sbr.rel (0) target = $region5
  $region4: #{fub_forward.1} parent=0 // pred_region
    _
  $region5: #{fub_forward.1} parent=0 // pred_fallthru
    _
  // Predicated region
  $region6: #{fub_forward.1} parent=0 // pred_check
    _
  $region7: #{fub_forward.1} parent=0 // pred_check_branch
    %11 = sbr.rel (0) target = $region9
  $region8: #{fub_forward.1} parent=0 // pred_region
    _
  $region9: #{fub_forward.1} parent=0 // pred_fallthru
    _
  // Predicated region
  $region10: #{fub_forward.1} parent=0 // pred_check
    _
  $region11: #{fub_forward.1} parent=0 // pred_check_branch
    %13 = sbr.rel (0) target = $region13
  $region12: #{fub_forward.1} parent=0 // pred_region
    _
  $region13: #{fub_forward.1} parent=0 // pred_fallthru
    _
  %v15 = vld [vmem:[%s0] sm:$0xff]
  %v16 = vld [vmem:[%s0 + $0x8] sm:$0xff]
  %s17 = scalar_lea.vmem %s0, 16
  %v18 = vld [vmem:[%s17] sm:$0xff]
  %v19 = vld [vmem:[%s17 + $0x8] sm:$0xff]
  %s20 = scalar_lea.vmem %s0, 32
  %v21 = vld [vmem:[%s20] sm:$0xff]
  %v22 = vld [vmem:[%s20 + $0x8] sm:$0xff]
  %s23 = scalar_lea.vmem %s0, 48
  %v24 = vld [vmem:[%s23] sm:$0xff]
  %v25 = vld [vmem:[%s23 + $0x8] sm:$0xff]
  %s26 = scalar_lea.vmem %s0, 64
  %v27 = vld [vmem:[%s26] sm:$0xff]
  %v28 = vld [vmem:[%s26 + $0x8] sm:$0xff]
  %s29 = scalar_lea.vmem %s0, 80
  %v30 = vld [vmem:[%s29] sm:$0xff]
  %v31 = vld [vmem:[%s29 + $0x8] sm:$0xff]
  %s32 = scalar_lea.vmem %s0, 96
  %v33 = vld [vmem:[%s32] sm:$0xff]
  %v34 = vld [vmem:[%s32 + $0x8] sm:$0xff]
  %s35 = scalar_lea.vmem %s0, 112
  %v36 = vld [vmem:[%s35] sm:$0xff]
  %v37 = vld [vmem:[%s35 + $0x8] sm:$0xff]
  %v38 = vadd.f32 %v15, %v16
  %39 = vadd.xlane.f32.xlu0 %v38
  %v40 = vpop.xlane.xlu0 %39
  %v41 = vrcp.pop 256.0
  %v42 = vmul.f32 %v40, %v41
  %v43 = vadd.f32 %v18, %v19
  %44 = vadd.xlane.f32.xlu0 %v43
  %v45 = vpop.xlane.xlu0 %44
  %v46 = vmul.f32 %v45, %v41
  %v47 = vadd.f32 %v21, %v22
  %48 = vadd.xlane.f32.xlu0 %v47
  %v49 = vpop.xlane.xlu0 %48
  %v50 = vmul.f32 %v49, %v41
  %v51 = vadd.f32 %v24, %v25
  %52 = vadd.xlane.f32.xlu0 %v51
  %v53 = vpop.xlane.xlu0 %52
  %v54 = vmul.f32 %v53, %v41
  %v55 = vadd.f32 %v27, %v28
  %56 = vadd.xlane.f32.xlu0 %v55
  %v57 = vpop.xlane.xlu0 %56
  %v58 = vmul.f32 %v57, %v41
  %v59 = vadd.f32 %v30, %v31
  %60 = vadd.xlane.f32.xlu0 %v59
  %v61 = vpop.xlane.xlu0 %60
  %v62 = vmul.f32 %v61, %v41
  %v63 = vadd.f32 %v33, %v34
  %64 = vadd.xlane.f32.xlu0 %v63
  %v65 = vpop.xlane.xlu0 %64
  %v66 = vmul.f32 %v65, %v41
  %v67 = vadd.f32 %v36, %v37
  %68 = vadd.xlane.f32.xlu0 %v67
  %v69 = vpop.xlane.xlu0 %68
  %v70 = vmul.f32 %v69, %v41
  %v71 = vadd.f32 %v15, %v21
  %v72 = vadd.f32 %v16, %v22
  %73 = vst [vmem:[#allocation2] sm:$0xff] %v71
  %74 = vst [vmem:[#allocation2 + $0x8] sm:$0xff] %v72
  %v75 = vadd.f32 %v18, %v24
  %v76 = vadd.f32 %v19, %v25
  %77 = vst [vmem:[#allocation2 + $0x10] sm:$0xff] %v75
  %78 = vst [vmem:[#allocation2 + $0x18] sm:$0xff] %v76
  %v79 = vadd.f32 %v15, %v27
  %v80 = vadd.f32 %v16, %v28
  %81 = vst [vmem:[#allocation2 + $0x20] sm:$0xff] %v79
  %82 = vst [vmem:[#allocation2 + $0x28] sm:$0xff] %v80
  %v83 = vadd.f32 %v18, %v30
  %v84 = vadd.f32 %v19, %v31
  %85 = vst [vmem:[#allocation2 + $0x30] sm:$0xff] %v83
  %86 = vst [vmem:[#allocation2 + $0x38] sm:$0xff] %v84
  %v87 = vadd.f32 %v15, %v33
  %v88 = vadd.f32 %v16, %v34
  %89 = vst [vmem:[#allocation2 + $0x40] sm:$0xff] %v87
  %90 = vst [vmem:[#allocation2 + $0x48] sm:$0xff] %v88
  %v91 = vadd.f32 %v18, %v36
  %v92 = vadd.f32 %v19, %v37
  %93 = vst [vmem:[#allocation2 + $0x50] sm:$0xff] %v91
  %94 = vst [vmem:[#allocation2 + $0x58] sm:$0xff] %v92
  %v95 = vadd.f32 %v21, %v27
  %v96 = vadd.f32 %v22, %v28
  %97 = vst [vmem:[#allocation2 + $0x60] sm:$0xff] %v95
  %98 = vst [vmem:[#allocation2 + $0x68] sm:$0xff] %v96
  %v99 = vadd.f32 %v24, %v30
  %v100 = vadd.f32 %v25, %v31
  %101 = vst [vmem:[#allocation2 + $0x70] sm:$0xff] %v99
  %102 = vst [vmem:[#allocation2 + $0x78] sm:$0xff] %v100
  %v103 = vadd.f32 %v21, %v33
  %v104 = vadd.f32 %v22, %v34
  %105 = vst [vmem:[#allocation2 + $0x80] sm:$0xff] %v103
  %106 = vst [vmem:[#allocation2 + $0x88] sm:$0xff] %v104
  %v107 = vadd.f32 %v24, %v36
  %v108 = vadd.f32 %v25, %v37
  %109 = vst [vmem:[#allocation2 + $0x90] sm:$0xff] %v107
  %110 = vst [vmem:[#allocation2 + $0x98] sm:$0xff] %v108
  %v111 = vadd.f32 %v27, %v33
  %v112 = vadd.f32 %v28, %v34
  %113 = vst [vmem:[#allocation2 + $0xa0] sm:$0xff] %v111
  %114 = vst [vmem:[#allocation2 + $0xa8] sm:$0xff] %v112
  %v115 = vadd.f32 %v30, %v36
  %v116 = vadd.f32 %v31, %v37
  %117 = vst [vmem:[#allocation2 + $0xb0] sm:$0xff] %v115
  %118 = vst [vmem:[#allocation2 + $0xb8] sm:$0xff] %v116
  %v119 = vadd.f32 %v42, %v50
  %v120 = vadd.f32 %v46, %v54
  %v121 = vadd.f32 %v42, %v58
  %v122 = vadd.f32 %v46, %v62
  %v123 = vadd.f32 %v42, %v66
  %v124 = vadd.f32 %v46, %v70
  %v125 = vadd.f32 %v50, %v58
  %v126 = vadd.f32 %v54, %v62
  %v127 = vadd.f32 %v50, %v66
  %v128 = vadd.f32 %v54, %v70
  %v129 = vadd.f32 %v58, %v66
  %v130 = vadd.f32 %v62, %v70
  %vm131 = vcmask 7168
  %v132 = vsel %vm131, %v119, %v120
  %vm133 = vcmask 15360
  %v134 = vsel %vm133, %v132, %v121
  %vm135 = vcmask 23552
  %v136 = vsel %vm135, %v134, %v122
  %vm137 = vcmask 31744
  %v138 = vsel %vm137, %v136, %v123
  %vm139 = vcmask 39936
  %v140 = vsel %vm139, %v138, %v124
  %vm141 = vcmask 48128
  %v142 = vsel %vm141, %v140, %v125
  %vm143 = vcmask 56320
  %v144 = vsel %vm143, %v142, %v126
  %vm145 = vcmask 64512
  %v146 = vsel %vm145, %v144, %v127
  %vm147 = vcmask 72704
  %v148 = vsel %vm147, %v146, %v128
  %vm149 = vcmask 80896
  %v150 = vsel %vm149, %v148, %v129
  %vm151 = vcmask 89088
  %v152 = vsel %vm151, %v150, %v130
  %vm153 = vcmask 97280
  %v154 = vsel %vm153, %v152, 0.0
  %155 = vst [vmem:[#allocation2 + $0xc0] sm:$0xff] %v154
  %v156 = vld [vmem:[%s1] sm:$0xf]
  %v157 = vpack.c.bf16 %v156, %v156
  %v158 = vld [vmem:[%s2] sm:$0xff]
  %v159 = vld [vmem:[%s2 + $0x8] sm:$0xff]
  %v160 = vpack.c.bf16 %v159, %v158
  %v161 = vld [vmem:[#allocation2] sm:$0xff]
  %v162 = vld [vmem:[#allocation2 + $0x8] sm:$0xff]
  %v163 = vld [vmem:[#allocation2 + $0x10] sm:$0xff]
  %v164 = vld [vmem:[#allocation2 + $0x18] sm:$0xff]
  %v165 = vld [vmem:[#allocation2 + $0x20] sm:$0xff]
  %v166 = vld [vmem:[#allocation2 + $0x28] sm:$0xff]
  %v167 = vld [vmem:[#allocation2 + $0x30] sm:$0xff]
  %v168 = vld [vmem:[#allocation2 + $0x38] sm:$0xff]
  %v169 = vld [vmem:[#allocation2 + $0x40] sm:$0xff]
  %v170 = vld [vmem:[#allocation2 + $0x48] sm:$0xff]
  %v171 = vld [vmem:[#allocation2 + $0x50] sm:$0xff]
  %v172 = vld [vmem:[#allocation2 + $0x58] sm:$0xff]
  %v173 = vld [vmem:[#allocation2 + $0x60] sm:$0xff]
  %v174 = vld [vmem:[#allocation2 + $0x68] sm:$0xff]
  %v175 = vld [vmem:[#allocation2 + $0x70] sm:$0xff]
  %v176 = vld [vmem:[#allocation2 + $0x78] sm:$0xff]
  %v177 = vld [vmem:[#allocation2 + $0x80] sm:$0xff]
  %v178 = vld [vmem:[#allocation2 + $0x88] sm:$0xff]
  %v179 = vld [vmem:[#allocation2 + $0x90] sm:$0xff]
  %v180 = vld [vmem:[#allocation2 + $0x98] sm:$0xff]
  %v181 = vld [vmem:[#allocation2 + $0xa0] sm:$0xff]
  %v182 = vld [vmem:[#allocation2 + $0xa8] sm:$0xff]
  %v183 = vld [vmem:[#allocation2 + $0xb0] sm:$0xff]
  %v184 = vld [vmem:[#allocation2 + $0xb8] sm:$0xff]
  %v185 = vld [vmem:[#allocation2 + $0xc0] sm:$0xff]
  %v186 = vpack.c.bf16 %v161, %v161
  %v187 = vpack.c.bf16 %v162, %v162
  %v188 = vpack.c.bf16 %v163, %v163
  %v189 = vpack.c.bf16 %v164, %v164
  %v190 = vpack.c.bf16 %v165, %v165
  %v191 = vpack.c.bf16 %v166, %v166
  %v192 = vpack.c.bf16 %v167, %v167
  %v193 = vpack.c.bf16 %v168, %v168
  %v194 = vpack.c.bf16 %v169, %v169
  %v195 = vpack.c.bf16 %v170, %v170
  %v196 = vpack.c.bf16 %v171, %v171
  %v197 = vpack.c.bf16 %v172, %v172
  %v198 = vpack.c.bf16 %v173, %v173
  %v199 = vpack.c.bf16 %v174, %v174
  %v200 = vpack.c.bf16 %v175, %v175
  %v201 = vpack.c.bf16 %v176, %v176
  %v202 = vpack.c.bf16 %v177, %v177
  %v203 = vpack.c.bf16 %v178, %v178
  %v204 = vpack.c.bf16 %v179, %v179
  %v205 = vpack.c.bf16 %v180, %v180
  %v206 = vpack.c.bf16 %v181, %v181
  %v207 = vpack.c.bf16 %v182, %v182
  %v208 = vpack.c.bf16 %v183, %v183
  %v209 = vpack.c.bf16 %v184, %v184
  %v210 = vpack.c.bf16 %v185, %v185
  %212 = vset.pattern.permute.xlu0 8
  %213 = vperm.xlu0 %212, %v156
  %v214 = vpop.permute.xlu0 %213
  %v217 = vsel %vm145, %v157, 0
  %vm219 = vcmask 1043456
  %v221 = vsel %vm219, %v186, 0
  %v224 = vsel %vm219, %v187, 0
  %v227 = vsel %vm219, %v188, 0
  %v230 = vsel %vm219, %v189, 0
  %v233 = vsel %vm219, %v190, 0
  %v236 = vsel %vm219, %v191, 0
  %v239 = vsel %vm219, %v192, 0
  %v242 = vsel %vm219, %v193, 0
  %v245 = vsel %vm219, %v194, 0
  %v248 = vsel %vm219, %v195, 0
  %v251 = vsel %vm219, %v196, 0
  %v254 = vsel %vm219, %v197, 0
  %v257 = vsel %vm219, %v198, 0
  %v260 = vsel %vm219, %v199, 0
  %v263 = vsel %vm219, %v200, 0
  %v266 = vsel %vm219, %v201, 0
  %v269 = vsel %vm219, %v202, 0
  %v272 = vsel %vm219, %v203, 0
  %v275 = vsel %vm219, %v204, 0
  %v278 = vsel %vm219, %v205, 0
  %v281 = vsel %vm219, %v206, 0
  %v284 = vsel %vm219, %v207, 0
  %v287 = vsel %vm219, %v208, 0
  %v290 = vsel %vm219, %v209, 0
  %v293 = vsel %vm219, %v210, 0
  %295 = vmatprep.subr.bf16.mxu0 %v224
  %296 = vmatpush1.bf16.msra.mxu0 %v221
  %297 = vmatprep.subr.bf16.mxu0 0
  %298 = vmatpush1.bf16.msra.mxu0 0
  %299 = vmatprep.subr.bf16.mxu0 0
  %300 = vmatpush1.bf16.msra.mxu0 0
  %301 = vmatprep.subr.bf16.mxu0 0
  %302 = vmatpush1.bf16.msra.mxu0 0
  %303 = vmatprep.subr.bf16.mxu0 0
  %304 = vmatpush1.bf16.msra.mxu0 0
  %305 = vmatprep.subr.bf16.mxu0 0
  %306 = vmatpush1.bf16.msra.mxu0 0
  %307 = vmatprep.subr.bf16.mxu0 0
  %308 = vmatpush1.bf16.msra.mxu0 0
  %309 = vmatprep.subr.bf16.mxu0 0
  %310 = vmatpush1.bf16.msra.mxu0 0
  %311 = vmatprep.subr.bf16.mxu0 0
  %312 = vmatpush1.bf16.msra.mxu0 0
  %313 = vmatprep.subr.bf16.mxu0 0
  %314 = vmatpush1.bf16.msra.mxu0 0
  %315 = vmatprep.subr.bf16.mxu0 0
  %316 = vmatpush1.bf16.msra.mxu0 0
  %317 = vmatprep.subr.bf16.mxu0 0
  %318 = vmatpush1.bf16.msra.mxu0 0
  %319 = vmatprep.subr.bf16.mxu0 0
  %320 = vmatpush1.bf16.msra.mxu0 0
  %321 = vmatprep.subr.bf16.mxu0 0
  %322 = vmatpush1.bf16.msra.mxu0 0
  %323 = vmatprep.subr.bf16.mxu0 0
  %324 = vmatpush1.bf16.msra.mxu0 0
  %325 = vmatprep.subr.bf16.mxu0 0
  %326 = vmatpush1.bf16.msra.mxu0 0
  %327 = vmatprep.mubr.bf16.mxu0 0
  %328 = vmatmul.mubr.bf16.gmra.mrb[0].mxu0 %v217
  %v329 = vpop.f32.mrb[0].mxu0
  %v330 = vadd.f32 %v214, %v329
  %v331 = vpop.f32.mrb[0].mxu0
  %v332 = vadd.f32 %v214, %v331
  %v333 = vpop.f32.mrb[0].mxu0
  %v334 = vpop.f32.mrb[0].mxu0
  %335 = vdwg.mxu0
  %336 = vmatprep.subr.bf16.mxu0 %v230
  %337 = vmatpush1.bf16.msra.mxu0 %v227
  %338 = vmatprep.subr.bf16.mxu0 0
  %339 = vmatpush1.bf16.msra.mxu0 0
  %340 = vmatprep.subr.bf16.mxu0 0
  %341 = vmatpush1.bf16.msra.mxu0 0
  %342 = vmatprep.subr.bf16.mxu0 0
  %343 = vmatpush1.bf16.msra.mxu0 0
  %344 = vmatprep.subr.bf16.mxu0 0
  %345 = vmatpush1.bf16.msra.mxu0 0
  %346 = vmatprep.subr.bf16.mxu0 0
  %347 = vmatpush1.bf16.msra.mxu0 0
  %348 = vmatprep.subr.bf16.mxu0 0
  %349 = vmatpush1.bf16.msra.mxu0 0
  %350 = vmatprep.subr.bf16.mxu0 0
  %351 = vmatpush1.bf16.msra.mxu0 0
  %352 = vmatprep.subr.bf16.mxu0 0
  %353 = vmatpush1.bf16.msra.mxu0 0
  %354 = vmatprep.subr.bf16.mxu0 0
  %355 = vmatpush1.bf16.msra.mxu0 0
  %356 = vmatprep.subr.bf16.mxu0 0
  %357 = vmatpush1.bf16.msra.mxu0 0
  %358 = vmatprep.subr.bf16.mxu0 0
  %359 = vmatpush1.bf16.msra.mxu0 0
  %360 = vmatprep.subr.bf16.mxu0 0
  %361 = vmatpush1.bf16.msra.mxu0 0
  %362 = vmatprep.subr.bf16.mxu0 0
  %363 = vmatpush1.bf16.msra.mxu0 0
  %364 = vmatprep.subr.bf16.mxu0 0
  %365 = vmatpush1.bf16.msra.mxu0 0
  %366 = vmatprep.subr.bf16.mxu0 0
  %367 = vmatpush1.bf16.msra.mxu0 0
  %368 = vmatprep.mubr.bf16.mxu0 0
  %369 = vmatmul.mubr.bf16.gmra.mrb[0].mxu0 %v217
  %v370 = vpop.f32.mrb[0].mxu0
  %v371 = vadd.f32 %v214, %v370
  %v372 = vpop.f32.mrb[0].mxu0
  %v373 = vadd.f32 %v214, %v372
  %v374 = vpop.f32.mrb[0].mxu0
  %v375 = vpop.f32.mrb[0].mxu0
  %376 = vdwg.mxu0
  %377 = vmatprep.subr.bf16.mxu0 %v236
  %378 = vmatpush1.bf16.msra.mxu0 %v233
  %379 = vmatprep.subr.bf16.mxu0 0
  %380 = vmatpush1.bf16.msra.mxu0 0
  %381 = vmatprep.subr.bf16.mxu0 0
  %382 = vmatpush1.bf16.msra.mxu0 0
  %383 = vmatprep.subr.bf16.mxu0 0
  %384 = vmatpush1.bf16.msra.mxu0 0
  %385 = vmatprep.subr.bf16.mxu0 0
  %386 = vmatpush1.bf16.msra.mxu0 0
  %387 = vmatprep.subr.bf16.mxu0 0
  %388 = vmatpush1.bf16.msra.mxu0 0
  %389 = vmatprep.subr.bf16.mxu0 0
  %390 = vmatpush1.bf16.msra.mxu0 0
  %391 = vmatprep.subr.bf16.mxu0 0
  %392 = vmatpush1.bf16.msra.mxu0 0
  %393 = vmatprep.subr.bf16.mxu0 0
  %394 = vmatpush1.bf16.msra.mxu0 0
  %395 = vmatprep.subr.bf16.mxu0 0
  %396 = vmatpush1.bf16.msra.mxu0 0
  %397 = vmatprep.subr.bf16.mxu0 0
  %398 = vmatpush1.bf16.msra.mxu0 0
  %399 = vmatprep.subr.bf16.mxu0 0
  %400 = vmatpush1.bf16.msra.mxu0 0
  %401 = vmatprep.subr.bf16.mxu0 0
  %402 = vmatpush1.bf16.msra.mxu0 0
  %403 = vmatprep.subr.bf16.mxu0 0
  %404 = vmatpush1.bf16.msra.mxu0 0
  %405 = vmatprep.subr.bf16.mxu0 0
  %406 = vmatpush1.bf16.msra.mxu0 0
  %407 = vmatprep.subr.bf16.mxu0 0
  %408 = vmatpush1.bf16.msra.mxu0 0
  %409 = vmatprep.mubr.bf16.mxu0 0
  %410 = vmatmul.mubr.bf16.gmra.mrb[0].mxu0 %v217
  %v411 = vpop.f32.mrb[0].mxu0
  %v412 = vadd.f32 %v214, %v411
  %v413 = vpop.f32.mrb[0].mxu0
  %v414 = vadd.f32 %v214, %v413
  %v415 = vpop.f32.mrb[0].mxu0
  %v416 = vpop.f32.mrb[0].mxu0
  %417 = vdwg.mxu0
  %418 = vmatprep.subr.bf16.mxu0 %v242
  %419 = vmatpush1.bf16.msra.mxu0 %v239
  %420 = vmatprep.subr.bf16.mxu0 0
  %421 = vmatpush1.bf16.msra.mxu0 0
  %422 = vmatprep.subr.bf16.mxu0 0
  %423 = vmatpush1.bf16.msra.mxu0 0
  %424 = vmatprep.subr.bf16.mxu0 0
  %425 = vmatpush1.bf16.msra.mxu0 0
  %426 = vmatprep.subr.bf16.mxu0 0
  %427 = vmatpush1.bf16.msra.mxu0 0
  %428 = vmatprep.subr.bf16.mxu0 0
  %429 = vmatpush1.bf16.msra.mxu0 0
  %430 = vmatprep.subr.bf16.mxu0 0
  %431 = vmatpush1.bf16.msra.mxu0 0
  %432 = vmatprep.subr.bf16.mxu0 0
  %433 = vmatpush1.bf16.msra.mxu0 0
  %434 = vmatprep.subr.bf16.mxu0 0
  %435 = vmatpush1.bf16.msra.mxu0 0
  %436 = vmatprep.subr.bf16.mxu0 0
  %437 = vmatpush1.bf16.msra.mxu0 0
  %438 = vmatprep.subr.bf16.mxu0 0
  %439 = vmatpush1.bf16.msra.mxu0 0
  %440 = vmatprep.subr.bf16.mxu0 0
  %441 = vmatpush1.bf16.msra.mxu0 0
  %442 = vmatprep.subr.bf16.mxu0 0
  %443 = vmatpush1.bf16.msra.mxu0 0
  %444 = vmatprep.subr.bf16.mxu0 0
  %445 = vmatpush1.bf16.msra.mxu0 0
  %446 = vmatprep.subr.bf16.mxu0 0
  %447 = vmatpush1.bf16.msra.mxu0 0
  %448 = vmatprep.subr.bf16.mxu0 0
  %449 = vmatpush1.bf16.msra.mxu0 0
  %450 = vmatprep.mubr.bf16.mxu0 0
  %451 = vmatmul.mubr.bf16.gmra.mrb[0].mxu0 %v217
  %v452 = vpop.f32.mrb[0].mxu0
  %v453 = vadd.f32 %v214, %v452
  %v454 = vpop.f32.mrb[0].mxu0
  %v455 = vadd.f32 %v214, %v454
  %v456 = vpop.f32.mrb[0].mxu0
  %v457 = vpop.f32.mrb[0].mxu0
  %458 = vdwg.mxu0
  %459 = vmatprep.subr.bf16.mxu0 %v248
  %460 = vmatpush1.bf16.msra.mxu0 %v245
  %461 = vmatprep.subr.bf16.mxu0 0
  %462 = vmatpush1.bf16.msra.mxu0 0
  %463 = vmatprep.subr.bf16.mxu0 0
  %464 = vmatpush1.bf16.msra.mxu0 0
  %465 = vmatprep.subr.bf16.mxu0 0
  %466 = vmatpush1.bf16.msra.mxu0 0
  %467 = vmatprep.subr.bf16.mxu0 0
  %468 = vmatpush1.bf16.msra.mxu0 0
  %469 = vmatprep.subr.bf16.mxu0 0
  %470 = vmatpush1.bf16.msra.mxu0 0
  %471 = vmatprep.subr.bf16.mxu0 0
  %472 = vmatpush1.bf16.msra.mxu0 0
  %473 = vmatprep.subr.bf16.mxu0 0
  %474 = vmatpush1.bf16.msra.mxu0 0
  %475 = vmatprep.subr.bf16.mxu0 0
  %476 = vmatpush1.bf16.msra.mxu0 0
  %477 = vmatprep.subr.bf16.mxu0 0
  %478 = vmatpush1.bf16.msra.mxu0 0
  %479 = vmatprep.subr.bf16.mxu0 0
  %480 = vmatpush1.bf16.msra.mxu0 0
  %481 = vmatprep.subr.bf16.mxu0 0
  %482 = vmatpush1.bf16.msra.mxu0 0
  %483 = vmatprep.subr.bf16.mxu0 0
  %484 = vmatpush1.bf16.msra.mxu0 0
  %485 = vmatprep.subr.bf16.mxu0 0
  %486 = vmatpush1.bf16.msra.mxu0 0
  %487 = vmatprep.subr.bf16.mxu0 0
  %488 = vmatpush1.bf16.msra.mxu0 0
  %489 = vmatprep.subr.bf16.mxu0 0
  %490 = vmatpush1.bf16.msra.mxu0 0
  %491 = vmatprep.mubr.bf16.mxu0 0
  %492 = vmatmul.mubr.bf16.gmra.mrb[0].mxu0 %v217
  %v493 = vpop.f32.mrb[0].mxu0
  %v494 = vadd.f32 %v214, %v493
  %v495 = vpop.f32.mrb[0].mxu0
  %v496 = vadd.f32 %v214, %v495
  %v497 = vpop.f32.mrb[0].mxu0
  %v498 = vpop.f32.mrb[0].mxu0
  %499 = vdwg.mxu0
  %500 = vmatprep.subr.bf16.mxu0 %v254
  %501 = vmatpush1.bf16.msra.mxu0 %v251
  %502 = vmatprep.subr.bf16.mxu0 0
  %503 = vmatpush1.bf16.msra.mxu0 0
  %504 = vmatprep.subr.bf16.mxu0 0
  %505 = vmatpush1.bf16.msra.mxu0 0
  %506 = vmatprep.subr.bf16.mxu0 0
  %507 = vmatpush1.bf16.msra.mxu0 0
  %508 = vmatprep.subr.bf16.mxu0 0
  %509 = vmatpush1.bf16.msra.mxu0 0
  %510 = vmatprep.subr.bf16.mxu0 0
  %511 = vmatpush1.bf16.msra.mxu0 0
  %512 = vmatprep.subr.bf16.mxu0 0
  %513 = vmatpush1.bf16.msra.mxu0 0
  %514 = vmatprep.subr.bf16.mxu0 0
  %515 = vmatpush1.bf16.msra.mxu0 0
  %516 = vmatprep.subr.bf16.mxu0 0
  %517 = vmatpush1.bf16.msra.mxu0 0
  %518 = vmatprep.subr.bf16.mxu0 0
  %519 = vmatpush1.bf16.msra.mxu0 0
  %520 = vmatprep.subr.bf16.mxu0 0
  %521 = vmatpush1.bf16.msra.mxu0 0
  %522 = vmatprep.subr.bf16.mxu0 0
  %523 = vmatpush1.bf16.msra.mxu0 0
  %524 = vmatprep.subr.bf16.mxu0 0
  %525 = vmatpush1.bf16.msra.mxu0 0
  %526 = vmatprep.subr.bf16.mxu0 0
  %527 = vmatpush1.bf16.msra.mxu0 0
  %528 = vmatprep.subr.bf16.mxu0 0
  %529 = vmatpush1.bf16.msra.mxu0 0
  %530 = vmatprep.subr.bf16.mxu0 0
  %531 = vmatpush1.bf16.msra.mxu0 0
  %532 = vmatprep.mubr.bf16.mxu0 0
  %533 = vmatmul.mubr.bf16.gmra.mrb[0].mxu0 %v217
  %v534 = vpop.f32.mrb[0].mxu0
  %v535 = vadd.f32 %v214, %v534
  %v536 = vpop.f32.mrb[0].mxu0
  %v537 = vadd.f32 %v214, %v536
  %v538 = vpop.f32.mrb[0].mxu0
  %v539 = vpop.f32.mrb[0].mxu0
  %540 = vdwg.mxu0
  %541 = vmatprep.subr.bf16.mxu0 %v260
  %542 = vmatpush1.bf16.msra.mxu0 %v257
  %543 = vmatprep.subr.bf16.mxu0 0
  %544 = vmatpush1.bf16.msra.mxu0 0
  %545 = vmatprep.subr.bf16.mxu0 0
  %546 = vmatpush1.bf16.msra.mxu0 0
  %547 = vmatprep.subr.bf16.mxu0 0
  %548 = vmatpush1.bf16.msra.mxu0 0
  %549 = vmatprep.subr.bf16.mxu0 0
  %550 = vmatpush1.bf16.msra.mxu0 0
  %551 = vmatprep.subr.bf16.mxu0 0
  %552 = vmatpush1.bf16.msra.mxu0 0
  %553 = vmatprep.subr.bf16.mxu0 0
  %554 = vmatpush1.bf16.msra.mxu0 0
  %555 = vmatprep.subr.bf16.mxu0 0
  %556 = vmatpush1.bf16.msra.mxu0 0
  %557 = vmatprep.subr.bf16.mxu0 0
  %558 = vmatpush1.bf16.msra.mxu0 0
  %559 = vmatprep.subr.bf16.mxu0 0
  %560 = vmatpush1.bf16.msra.mxu0 0
  %561 = vmatprep.subr.bf16.mxu0 0
  %562 = vmatpush1.bf16.msra.mxu0 0
  %563 = vmatprep.subr.bf16.mxu0 0
  %564 = vmatpush1.bf16.msra.mxu0 0
  %565 = vmatprep.subr.bf16.mxu0 0
  %566 = vmatpush1.bf16.msra.mxu0 0
  %567 = vmatprep.subr.bf16.mxu0 0
  %568 = vmatpush1.bf16.msra.mxu0 0
  %569 = vmatprep.subr.bf16.mxu0 0
  %570 = vmatpush1.bf16.msra.mxu0 0
  %571 = vmatprep.subr.bf16.mxu0 0
  %572 = vmatpush1.bf16.msra.mxu0 0
  %573 = vmatprep.mubr.bf16.mxu0 0
  %574 = vmatmul.mubr.bf16.gmra.mrb[0].mxu0 %v217
  %v575 = vpop.f32.mrb[0].mxu0
  %v576 = vadd.f32 %v214, %v575
  %v577 = vpop.f32.mrb[0].mxu0
  %v578 = vadd.f32 %v214, %v577
  %v579 = vpop.f32.mrb[0].mxu0
  %v580 = vpop.f32.mrb[0].mxu0
  %581 = vdwg.mxu0
  %582 = vmatprep.subr.bf16.mxu0 %v266
  %583 = vmatpush1.bf16.msra.mxu0 %v263
  %584 = vmatprep.subr.bf16.mxu0 0
  %585 = vmatpush1.bf16.msra.mxu0 0
  %586 = vmatprep.subr.bf16.mxu0 0
  %587 = vmatpush1.bf16.msra.mxu0 0
  %588 = vmatprep.subr.bf16.mxu0 0
  %589 = vmatpush1.bf16.msra.mxu0 0
  %590 = vmatprep.subr.bf16.mxu0 0
  %591 = vmatpush1.bf16.msra.mxu0 0
  %592 = vmatprep.subr.bf16.mxu0 0
  %593 = vmatpush1.bf16.msra.mxu0 0
  %594 = vmatprep.subr.bf16.mxu0 0
  %595 = vmatpush1.bf16.msra.mxu0 0
  %596 = vmatprep.subr.bf16.mxu0 0
  %597 = vmatpush1.bf16.msra.mxu0 0
  %598 = vmatprep.subr.bf16.mxu0 0
  %599 = vmatpush1.bf16.msra.mxu0 0
  %600 = vmatprep.subr.bf16.mxu0 0
  %601 = vmatpush1.bf16.msra.mxu0 0
  %602 = vmatprep.subr.bf16.mxu0 0
  %603 = vmatpush1.bf16.msra.mxu0 0
  %604 = vmatprep.subr.bf16.mxu0 0
  %605 = vmatpush1.bf16.msra.mxu0 0
  %606 = vmatprep.subr.bf16.mxu0 0
  %607 = vmatpush1.bf16.msra.mxu0 0
  %608 = vmatprep.subr.bf16.mxu0 0
  %609 = vmatpush1.bf16.msra.mxu0 0
  %610 = vmatprep.subr.bf16.mxu0 0
  %611 = vmatpush1.bf16.msra.mxu0 0
  %612 = vmatprep.subr.bf16.mxu0 0
  %613 = vmatpush1.bf16.msra.mxu0 0
  %614 = vmatprep.mubr.bf16.mxu0 0
  %615 = vmatmul.mubr.bf16.gmra.mrb[0].mxu0 %v217
  %v616 = vpop.f32.mrb[0].mxu0
  %v617 = vadd.f32 %v214, %v616
  %v618 = vpop.f32.mrb[0].mxu0
  %v619 = vadd.f32 %v214, %v618
  %v620 = vpop.f32.mrb[0].mxu0
  %v621 = vpop.f32.mrb[0].mxu0
  %622 = vdwg.mxu0
  %623 = vmatprep.subr.bf16.mxu0 %v272
  %624 = vmatpush1.bf16.msra.mxu0 %v269
  %625 = vmatprep.subr.bf16.mxu0 0
  %626 = vmatpush1.bf16.msra.mxu0 0
  %627 = vmatprep.subr.bf16.mxu0 0
  %628 = vmatpush1.bf16.msra.mxu0 0
  %629 = vmatprep.subr.bf16.mxu0 0
  %630 = vmatpush1.bf16.msra.mxu0 0
  %631 = vmatprep.subr.bf16.mxu0 0
  %632 = vmatpush1.bf16.msra.mxu0 0
  %633 = vmatprep.subr.bf16.mxu0 0
  %634 = vmatpush1.bf16.msra.mxu0 0
  %635 = vmatprep.subr.bf16.mxu0 0
  %636 = vmatpush1.bf16.msra.mxu0 0
  %637 = vmatprep.subr.bf16.mxu0 0
  %638 = vmatpush1.bf16.msra.mxu0 0
  %639 = vmatprep.subr.bf16.mxu0 0
  %640 = vmatpush1.bf16.msra.mxu0 0
  %641 = vmatprep.subr.bf16.mxu0 0
  %642 = vmatpush1.bf16.msra.mxu0 0
  %643 = vmatprep.subr.bf16.mxu0 0
  %644 = vmatpush1.bf16.msra.mxu0 0
  %645 = vmatprep.subr.bf16.mxu0 0
  %646 = vmatpush1.bf16.msra.mxu0 0
  %647 = vmatprep.subr.bf16.mxu0 0
  %648 = vmatpush1.bf16.msra.mxu0 0
  %649 = vmatprep.subr.bf16.mxu0 0
  %650 = vmatpush1.bf16.msra.mxu0 0
  %651 = vmatprep.subr.bf16.mxu0 0
  %652 = vmatpush1.bf16.msra.mxu0 0
  %653 = vmatprep.subr.bf16.mxu0 0
  %654 = vmatpush1.bf16.msra.mxu0 0
  %655 = vmatprep.mubr.bf16.mxu0 0
  %656 = vmatmul.mubr.bf16.gmra.mrb[0].mxu0 %v217
  %v657 = vpop.f32.mrb[0].mxu0
  %v658 = vadd.f32 %v214, %v657
  %v659 = vpop.f32.mrb[0].mxu0
  %v660 = vadd.f32 %v214, %v659
  %v661 = vpop.f32.mrb[0].mxu0
  %v662 = vpop.f32.mrb[0].mxu0
  %663 = vdwg.mxu0
  %664 = vmatprep.subr.bf16.mxu0 %v278
  %665 = vmatpush1.bf16.msra.mxu0 %v275
  %666 = vmatprep.subr.bf16.mxu0 0
  %667 = vmatpush1.bf16.msra.mxu0 0
  %668 = vmatprep.subr.bf16.mxu0 0
  %669 = vmatpush1.bf16.msra.mxu0 0
  %670 = vmatprep.subr.bf16.mxu0 0
  %671 = vmatpush1.bf16.msra.mxu0 0
  %672 = vmatprep.subr.bf16.mxu0 0
  %673 = vmatpush1.bf16.msra.mxu0 0
  %674 = vmatprep.subr.bf16.mxu0 0
  %675 = vmatpush1.bf16.msra.mxu0 0
  %676 = vmatprep.subr.bf16.mxu0 0
  %677 = vmatpush1.bf16.msra.mxu0 0
  %678 = vmatprep.subr.bf16.mxu0 0
  %679 = vmatpush1.bf16.msra.mxu0 0
  %680 = vmatprep.subr.bf16.mxu0 0
  %681 = vmatpush1.bf16.msra.mxu0 0
  %682 = vmatprep.subr.bf16.mxu0 0
  %683 = vmatpush1.bf16.msra.mxu0 0
  %684 = vmatprep.subr.bf16.mxu0 0
  %685 = vmatpush1.bf16.msra.mxu0 0
  %686 = vmatprep.subr.bf16.mxu0 0
  %687 = vmatpush1.bf16.msra.mxu0 0
  %688 = vmatprep.subr.bf16.mxu0 0
  %689 = vmatpush1.bf16.msra.mxu0 0
  %690 = vmatprep.subr.bf16.mxu0 0
  %691 = vmatpush1.bf16.msra.mxu0 0
  %692 = vmatprep.subr.bf16.mxu0 0
  %693 = vmatpush1.bf16.msra.mxu0 0
  %694 = vmatprep.subr.bf16.mxu0 0
  %695 = vmatpush1.bf16.msra.mxu0 0
  %696 = vmatprep.mubr.bf16.mxu0 0
  %697 = vmatmul.mubr.bf16.gmra.mrb[0].mxu0 %v217
  %v698 = vpop.f32.mrb[0].mxu0
  %v699 = vadd.f32 %v214, %v698
  %v700 = vpop.f32.mrb[0].mxu0
  %v701 = vadd.f32 %v214, %v700
  %v702 = vpop.f32.mrb[0].mxu0
  %v703 = vpop.f32.mrb[0].mxu0
  %704 = vdwg.mxu0
  %705 = vmatprep.subr.bf16.mxu0 %v284
  %706 = vmatpush1.bf16.msra.mxu0 %v281
  %707 = vmatprep.subr.bf16.mxu0 0
  %708 = vmatpush1.bf16.msra.mxu0 0
  %709 = vmatprep.subr.bf16.mxu0 0
  %710 = vmatpush1.bf16.msra.mxu0 0
  %711 = vmatprep.subr.bf16.mxu0 0
  %712 = vmatpush1.bf16.msra.mxu0 0
  %713 = vmatprep.subr.bf16.mxu0 0
  %714 = vmatpush1.bf16.msra.mxu0 0
  %715 = vmatprep.subr.bf16.mxu0 0
  %716 = vmatpush1.bf16.msra.mxu0 0
  %717 = vmatprep.subr.bf16.mxu0 0
  %718 = vmatpush1.bf16.msra.mxu0 0
  %719 = vmatprep.subr.bf16.mxu0 0
  %720 = vmatpush1.bf16.msra.mxu0 0
  %721 = vmatprep.subr.bf16.mxu0 0
  %722 = vmatpush1.bf16.msra.mxu0 0
  %723 = vmatprep.subr.bf16.mxu0 0
  %724 = vmatpush1.bf16.msra.mxu0 0
  %725 = vmatprep.subr.bf16.mxu0 0
  %726 = vmatpush1.bf16.msra.mxu0 0
  %727 = vmatprep.subr.bf16.mxu0 0
  %728 = vmatpush1.bf16.msra.mxu0 0
  %729 = vmatprep.subr.bf16.mxu0 0
  %730 = vmatpush1.bf16.msra.mxu0 0
  %731 = vmatprep.subr.bf16.mxu0 0
  %732 = vmatpush1.bf16.msra.mxu0 0
  %733 = vmatprep.subr.bf16.mxu0 0
  %734 = vmatpush1.bf16.msra.mxu0 0
  %735 = vmatprep.subr.bf16.mxu0 0
  %736 = vmatpush1.bf16.msra.mxu0 0
  %737 = vmatprep.mubr.bf16.mxu0 0
  %738 = vmatmul.mubr.bf16.gmra.mrb[0].mxu0 %v217
  %v739 = vpop.f32.mrb[0].mxu0
  %v740 = vadd.f32 %v214, %v739
  %v741 = vpop.f32.mrb[0].mxu0
  %v742 = vadd.f32 %v214, %v741
  %v743 = vpop.f32.mrb[0].mxu0
  %v744 = vpop.f32.mrb[0].mxu0
  %745 = vdwg.mxu0
  %746 = vmatprep.subr.bf16.mxu0 %v290
  %747 = vmatpush1.bf16.msra.mxu0 %v287
  %748 = vmatprep.subr.bf16.mxu0 0
  %749 = vmatpush1.bf16.msra.mxu0 0
  %750 = vmatprep.subr.bf16.mxu0 0
  %751 = vmatpush1.bf16.msra.mxu0 0
  %752 = vmatprep.subr.bf16.mxu0 0
  %753 = vmatpush1.bf16.msra.mxu0 0
  %754 = vmatprep.subr.bf16.mxu0 0
  %755 = vmatpush1.bf16.msra.mxu0 0
  %756 = vmatprep.subr.bf16.mxu0 0
  %757 = vmatpush1.bf16.msra.mxu0 0
  %758 = vmatprep.subr.bf16.mxu0 0
  %759 = vmatpush1.bf16.msra.mxu0 0
  %760 = vmatprep.subr.bf16.mxu0 0
  %761 = vmatpush1.bf16.msra.mxu0 0
  %762 = vmatprep.subr.bf16.mxu0 0
  %763 = vmatpush1.bf16.msra.mxu0 0
  %764 = vmatprep.subr.bf16.mxu0 0
  %765 = vmatpush1.bf16.msra.mxu0 0
  %766 = vmatprep.subr.bf16.mxu0 0
  %767 = vmatpush1.bf16.msra.mxu0 0
  %768 = vmatprep.subr.bf16.mxu0 0
  %769 = vmatpush1.bf16.msra.mxu0 0
  %770 = vmatprep.subr.bf16.mxu0 0
  %771 = vmatpush1.bf16.msra.mxu0 0
  %772 = vmatprep.subr.bf16.mxu0 0
  %773 = vmatpush1.bf16.msra.mxu0 0
  %774 = vmatprep.subr.bf16.mxu0 0
  %775 = vmatpush1.bf16.msra.mxu0 0
  %776 = vmatprep.subr.bf16.mxu0 0
  %777 = vmatpush1.bf16.msra.mxu0 0
  %778 = vmatprep.mubr.bf16.mxu0 0
  %779 = vmatmul.mubr.bf16.gmra.mrb[0].mxu0 %v217
  %v780 = vpop.f32.mrb[0].mxu0
  %v781 = vadd.f32 %v214, %v780
  %v782 = vpop.f32.mrb[0].mxu0
  %v783 = vadd.f32 %v214, %v782
  %v784 = vpop.f32.mrb[0].mxu0
  %v785 = vpop.f32.mrb[0].mxu0
  %786 = vdwg.mxu0
  %787 = vmatprep.subr.bf16.mxu0 0
  %788 = vmatpush1.bf16.msra.mxu0 %v293
  %789 = vmatprep.subr.bf16.mxu0 0
  %790 = vmatpush1.bf16.msra.mxu0 0
  %791 = vmatprep.subr.bf16.mxu0 0
  %792 = vmatpush1.bf16.msra.mxu0 0
  %793 = vmatprep.subr.bf16.mxu0 0
  %794 = vmatpush1.bf16.msra.mxu0 0
  %795 = vmatprep.subr.bf16.mxu0 0
  %796 = vmatpush1.bf16.msra.mxu0 0
  %797 = vmatprep.subr.bf16.mxu0 0
  %798 = vmatpush1.bf16.msra.mxu0 0
  %799 = vmatprep.subr.bf16.mxu0 0
  %800 = vmatpush1.bf16.msra.mxu0 0
  %801 = vmatprep.subr.bf16.mxu0 0
  %802 = vmatpush1.bf16.msra.mxu0 0
  %803 = vmatprep.subr.bf16.mxu0 0
  %804 = vmatpush1.bf16.msra.mxu0 0
  %805 = vmatprep.subr.bf16.mxu0 0
  %806 = vmatpush1.bf16.msra.mxu0 0
  %807 = vmatprep.subr.bf16.mxu0 0
  %808 = vmatpush1.bf16.msra.mxu0 0
  %809 = vmatprep.subr.bf16.mxu0 0
  %810 = vmatpush1.bf16.msra.mxu0 0
  %811 = vmatprep.subr.bf16.mxu0 0
  %812 = vmatpush1.bf16.msra.mxu0 0
  %813 = vmatprep.subr.bf16.mxu0 0
  %814 = vmatpush1.bf16.msra.mxu0 0
  %815 = vmatprep.subr.bf16.mxu0 0
  %816 = vmatpush1.bf16.msra.mxu0 0
  %817 = vmatprep.subr.bf16.mxu0 0
  %818 = vmatpush1.bf16.msra.mxu0 0
  %819 = vmatprep.mubr.bf16.mxu0 0
  %820 = vmatmul.mubr.bf16.gmra.mrb[0].mxu0 %v217
  %v821 = vpop.f32.mrb[0].mxu0
  %v822 = vadd.f32 %v214, %v821
  %v823 = vpop.f32.mrb[0].mxu0
  %v824 = vpop.f32.mrb[0].mxu0
  %v825 = vpop.f32.mrb[0].mxu0
  %826 = vdwg.mxu0
  %v827 = vmax.f32 %v330, 0.0
  %v828 = vmax.f32 %v332, 0.0
  %v829 = vmax.f32 %v371, 0.0
  %v830 = vmax.f32 %v373, 0.0
  %v831 = vmax.f32 %v412, 0.0
  %v832 = vmax.f32 %v414, 0.0
  %v833 = vmax.f32 %v453, 0.0
  %v834 = vmax.f32 %v455, 0.0
  %v835 = vmax.f32 %v494, 0.0
  %v836 = vmax.f32 %v496, 0.0
  %v837 = vmax.f32 %v535, 0.0
  %v838 = vmax.f32 %v537, 0.0
  %v839 = vmax.f32 %v576, 0.0
  %v840 = vmax.f32 %v578, 0.0
  %v841 = vmax.f32 %v617, 0.0
  %v842 = vmax.f32 %v619, 0.0
  %v843 = vmax.f32 %v658, 0.0
  %v844 = vmax.f32 %v660, 0.0
  %v845 = vmax.f32 %v699, 0.0
  %v846 = vmax.f32 %v701, 0.0
  %v847 = vmax.f32 %v740, 0.0
  %v848 = vmax.f32 %v742, 0.0
  %v849 = vmax.f32 %v781, 0.0
  %v850 = vmax.f32 %v783, 0.0
  %v851 = vmax.f32 %v822, 0.0
  %v852 = vpack.c.bf16 %v827, %v827
  %v853 = vpack.c.bf16 %v828, %v828
  %v854 = vpack.c.bf16 %v829, %v829
  %v855 = vpack.c.bf16 %v830, %v830
  %v856 = vpack.c.bf16 %v831, %v831
  %v857 = vpack.c.bf16 %v832, %v832
  %v858 = vpack.c.bf16 %v833, %v833
  %v859 = vpack.c.bf16 %v834, %v834
  %v860 = vpack.c.bf16 %v835, %v835
  %v861 = vpack.c.bf16 %v836, %v836
  %v862 = vpack.c.bf16 %v837, %v837
  %v863 = vpack.c.bf16 %v838, %v838
  %v864 = vpack.c.bf16 %v839, %v839
  %v865 = vpack.c.bf16 %v840, %v840
  %v866 = vpack.c.bf16 %v841, %v841
  %v867 = vpack.c.bf16 %v842, %v842
  %v868 = vpack.c.bf16 %v843, %v843
  %v869 = vpack.c.bf16 %v844, %v844
  %v870 = vpack.c.bf16 %v845, %v845
  %v871 = vpack.c.bf16 %v846, %v846
  %v872 = vpack.c.bf16 %v847, %v847
  %v873 = vpack.c.bf16 %v848, %v848
  %v874 = vpack.c.bf16 %v849, %v849
  %v875 = vpack.c.bf16 %v850, %v850
  %v876 = vpack.c.bf16 %v851, %v851
  %878 = vset.pattern.permute.xlu0 4
  %879 = vperm.xlu0 %878, %v158
  %v880 = vpop.permute.xlu0 %879
  %883 = vset.pattern.permute.xlu0 4
  %884 = vperm.xlu0 %883, %v159
  %v885 = vpop.permute.xlu0 %884
  %v888 = vsel %vm137, %v160, 0
  %vm890 = vcmask 1041408
  %v892 = vsel %vm890, %v852, 0
  %v895 = vsel %vm890, %v853, 0
  %v898 = vsel %vm890, %v854, 0
  %v901 = vsel %vm890, %v855, 0
  %v904 = vsel %vm890, %v856, 0
  %v907 = vsel %vm890, %v857, 0
  %v910 = vsel %vm890, %v858, 0
  %v913 = vsel %vm890, %v859, 0
  %v916 = vsel %vm890, %v860, 0
  %v919 = vsel %vm890, %v861, 0
  %v922 = vsel %vm890, %v862, 0
  %v925 = vsel %vm890, %v863, 0
  %v928 = vsel %vm890, %v864, 0
  %v931 = vsel %vm890, %v865, 0
  %v934 = vsel %vm890, %v866, 0
  %v937 = vsel %vm890, %v867, 0
  %v940 = vsel %vm890, %v868, 0
  %v943 = vsel %vm890, %v869, 0
  %v946 = vsel %vm890, %v870, 0
  %v949 = vsel %vm890, %v871, 0
  %v952 = vsel %vm890, %v872, 0
  %v955 = vsel %vm890, %v873, 0
  %v958 = vsel %vm890, %v874, 0
  %v961 = vsel %vm890, %v875, 0
  %v964 = vsel %vm890, %v876, 0
  %966 = vmatprep.subr.bf16.mxu0 %v895
  %967 = vmatpush1.bf16.msra.mxu0 %v892
  %968 = vmatprep.subr.bf16.mxu0 0
  %969 = vmatpush1.bf16.msra.mxu0 0
  %970 = vmatprep.subr.bf16.mxu0 0
  %971 = vmatpush1.bf16.msra.mxu0 0
  %972 = vmatprep.subr.bf16.mxu0 0
  %973 = vmatpush1.bf16.msra.mxu0 0
  %974 = vmatprep.subr.bf16.mxu0 0
  %975 = vmatpush1.bf16.msra.mxu0 0
  %976 = vmatprep.subr.bf16.mxu0 0
  %977 = vmatpush1.bf16.msra.mxu0 0
  %978 = vmatprep.subr.bf16.mxu0 0
  %979 = vmatpush1.bf16.msra.mxu0 0
  %980 = vmatprep.subr.bf16.mxu0 0
  %981 = vmatpush1.bf16.msra.mxu0 0
  %982 = vmatprep.subr.bf16.mxu0 0
  %983 = vmatpush1.bf16.msra.mxu0 0
  %984 = vmatprep.subr.bf16.mxu0 0
  %985 = vmatpush1.bf16.msra.mxu0 0
  %986 = vmatprep.subr.bf16.mxu0 0
  %987 = vmatpush1.bf16.msra.mxu0 0
  %988 = vmatprep.subr.bf16.mxu0 0
  %989 = vmatpush1.bf16.msra.mxu0 0
  %990 = vmatprep.subr.bf16.mxu0 0
  %991 = vmatpush1.bf16.msra.mxu0 0
  %992 = vmatprep.subr.bf16.mxu0 0
  %993 = vmatpush1.bf16.msra.mxu0 0
  %994 = vmatprep.subr.bf16.mxu0 0
  %995 = vmatpush1.bf16.msra.mxu0 0
  %996 = vmatprep.subr.bf16.mxu0 0
  %997 = vmatpush1.bf16.msra.mxu0 0
  %998 = vmatprep.mubr.bf16.mxu0 0
  %999 = vmatmul.mubr.bf16.gmra.mrb[0].mxu0 %v888
  %v1000 = vpop.f32.mrb[0].mxu0
  %v1001 = vadd.f32 %v880, %v1000
  %v1002 = vpop.f32.mrb[0].mxu0
  %v1003 = vadd.f32 %v880, %v1002
  %v1004 = vpop.f32.mrb[0].mxu0
  %v1005 = vpop.f32.mrb[0].mxu0
  %1006 = vdwg.mxu0
  %1007 = vmatprep.subr.bf16.mxu0 %v901
  %1008 = vmatpush1.bf16.msra.mxu0 %v898
  %1009 = vmatprep.subr.bf16.mxu0 0
  %1010 = vmatpush1.bf16.msra.mxu0 0
  %1011 = vmatprep.subr.bf16.mxu0 0
  %1012 = vmatpush1.bf16.msra.mxu0 0
  %1013 = vmatprep.subr.bf16.mxu0 0
  %1014 = vmatpush1.bf16.msra.mxu0 0
  %1015 = vmatprep.subr.bf16.mxu0 0
  %1016 = vmatpush1.bf16.msra.mxu0 0
  %1017 = vmatprep.subr.bf16.mxu0 0
  %1018 = vmatpush1.bf16.msra.mxu0 0
  %1019 = vmatprep.subr.bf16.mxu0 0
  %1020 = vmatpush1.bf16.msra.mxu0 0
  %1021 = vmatprep.subr.bf16.mxu0 0
  %1022 = vmatpush1.bf16.msra.mxu0 0
  %1023 = vmatprep.subr.bf16.mxu0 0
  %1024 = vmatpush1.bf16.msra.mxu0 0
  %1025 = vmatprep.subr.bf16.mxu0 0
  %1026 = vmatpush1.bf16.msra.mxu0 0
  %1027 = vmatprep.subr.bf16.mxu0 0
  %1028 = vmatpush1.bf16.msra.mxu0 0
  %1029 = vmatprep.subr.bf16.mxu0 0
  %1030 = vmatpush1.bf16.msra.mxu0 0
  %1031 = vmatprep.subr.bf16.mxu0 0
  %1032 = vmatpush1.bf16.msra.mxu0 0
  %1033 = vmatprep.subr.bf16.mxu0 0
  %1034 = vmatpush1.bf16.msra.mxu0 0
  %1035 = vmatprep.subr.bf16.mxu0 0
  %1036 = vmatpush1.bf16.msra.mxu0 0
  %1037 = vmatprep.subr.bf16.mxu0 0
  %1038 = vmatpush1.bf16.msra.mxu0 0
  %1039 = vmatprep.mubr.bf16.mxu0 0
  %1040 = vmatmul.mubr.bf16.gmra.mrb[0].mxu0 %v888
  %v1041 = vpop.f32.mrb[0].mxu0
  %v1042 = vadd.f32 %v880, %v1041
  %v1043 = vpop.f32.mrb[0].mxu0
  %v1044 = vadd.f32 %v880, %v1043
  %v1045 = vpop.f32.mrb[0].mxu0
  %v1046 = vpop.f32.mrb[0].mxu0
  %1047 = vdwg.mxu0
  %1048 = vmatprep.subr.bf16.mxu0 %v907
  %1049 = vmatpush1.bf16.msra.mxu0 %v904
  %1050 = vmatprep.subr.bf16.mxu0 0
  %1051 = vmatpush1.bf16.msra.mxu0 0
  %1052 = vmatprep.subr.bf16.mxu0 0
  %1053 = vmatpush1.bf16.msra.mxu0 0
  %1054 = vmatprep.subr.bf16.mxu0 0
  %1055 = vmatpush1.bf16.msra.mxu0 0
  %1056 = vmatprep.subr.bf16.mxu0 0
  %1057 = vmatpush1.bf16.msra.mxu0 0
  %1058 = vmatprep.subr.bf16.mxu0 0
  %1059 = vmatpush1.bf16.msra.mxu0 0
  %1060 = vmatprep.subr.bf16.mxu0 0
  %1061 = vmatpush1.bf16.msra.mxu0 0
  %1062 = vmatprep.subr.bf16.mxu0 0
  %1063 = vmatpush1.bf16.msra.mxu0 0
  %1064 = vmatprep.subr.bf16.mxu0 0
  %1065 = vmatpush1.bf16.msra.mxu0 0
  %1066 = vmatprep.subr.bf16.mxu0 0
  %1067 = vmatpush1.bf16.msra.mxu0 0
  %1068 = vmatprep.subr.bf16.mxu0 0
  %1069 = vmatpush1.bf16.msra.mxu0 0
  %1070 = vmatprep.subr.bf16.mxu0 0
  %1071 = vmatpush1.bf16.msra.mxu0 0
  %1072 = vmatprep.subr.bf16.mxu0 0
  %1073 = vmatpush1.bf16.msra.mxu0 0
  %1074 = vmatprep.subr.bf16.mxu0 0
  %1075 = vmatpush1.bf16.msra.mxu0 0
  %1076 = vmatprep.subr.bf16.mxu0 0
  %1077 = vmatpush1.bf16.msra.mxu0 0
  %1078 = vmatprep.subr.bf16.mxu0 0
  %1079 = vmatpush1.bf16.msra.mxu0 0
  %1080 = vmatprep.mubr.bf16.mxu0 0
  %1081 = vmatmul.mubr.bf16.gmra.mrb[0].mxu0 %v888
  %v1082 = vpop.f32.mrb[0].mxu0
  %v1083 = vadd.f32 %v880, %v1082
  %v1084 = vpop.f32.mrb[0].mxu0
  %v1085 = vadd.f32 %v880, %v1084
  %v1086 = vpop.f32.mrb[0].mxu0
  %v1087 = vpop.f32.mrb[0].mxu0
  %1088 = vdwg.mxu0
  %1089 = vmatprep.subr.bf16.mxu0 %v913
  %1090 = vmatpush1.bf16.msra.mxu0 %v910
  %1091 = vmatprep.subr.bf16.mxu0 0
  %1092 = vmatpush1.bf16.msra.mxu0 0
  %1093 = vmatprep.subr.bf16.mxu0 0
  %1094 = vmatpush1.bf16.msra.mxu0 0
  %1095 = vmatprep.subr.bf16.mxu0 0
  %1096 = vmatpush1.bf16.msra.mxu0 0
  %1097 = vmatprep.subr.bf16.mxu0 0
  %1098 = vmatpush1.bf16.msra.mxu0 0
  %1099 = vmatprep.subr.bf16.mxu0 0
  %1100 = vmatpush1.bf16.msra.mxu0 0
  %1101 = vmatprep.subr.bf16.mxu0 0
  %1102 = vmatpush1.bf16.msra.mxu0 0
  %1103 = vmatprep.subr.bf16.mxu0 0
  %1104 = vmatpush1.bf16.msra.mxu0 0
  %1105 = vmatprep.subr.bf16.mxu0 0
  %1106 = vmatpush1.bf16.msra.mxu0 0
  %1107 = vmatprep.subr.bf16.mxu0 0
  %1108 = vmatpush1.bf16.msra.mxu0 0
  %1109 = vmatprep.subr.bf16.mxu0 0
  %1110 = vmatpush1.bf16.msra.mxu0 0
  %1111 = vmatprep.subr.bf16.mxu0 0
  %1112 = vmatpush1.bf16.msra.mxu0 0
  %1113 = vmatprep.subr.bf16.mxu0 0
  %1114 = vmatpush1.bf16.msra.mxu0 0
  %1115 = vmatprep.subr.bf16.mxu0 0
  %1116 = vmatpush1.bf16.msra.mxu0 0
  %1117 = vmatprep.subr.bf16.mxu0 0
  %1118 = vmatpush1.bf16.msra.mxu0 0
  %1119 = vmatprep.subr.bf16.mxu0 0
  %1120 = vmatpush1.bf16.msra.mxu0 0
  %1121 = vmatprep.mubr.bf16.mxu0 0
  %1122 = vmatmul.mubr.bf16.gmra.mrb[0].mxu0 %v888
  %v1123 = vpop.f32.mrb[0].mxu0
  %v1124 = vadd.f32 %v880, %v1123
  %v1125 = vpop.f32.mrb[0].mxu0
  %v1126 = vadd.f32 %v880, %v1125
  %v1127 = vpop.f32.mrb[0].mxu0
  %v1128 = vpop.f32.mrb[0].mxu0
  %1129 = vdwg.mxu0
  %1130 = vmatprep.subr.bf16.mxu0 %v919
  %1131 = vmatpush1.bf16.msra.mxu0 %v916
  %1132 = vmatprep.subr.bf16.mxu0 0
  %1133 = vmatpush1.bf16.msra.mxu0 0
  %1134 = vmatprep.subr.bf16.mxu0 0
  %1135 = vmatpush1.bf16.msra.mxu0 0
  %1136 = vmatprep.subr.bf16.mxu0 0
  %1137 = vmatpush1.bf16.msra.mxu0 0
  %1138 = vmatprep.subr.bf16.mxu0 0
  %1139 = vmatpush1.bf16.msra.mxu0 0
  %1140 = vmatprep.subr.bf16.mxu0 0
  %1141 = vmatpush1.bf16.msra.mxu0 0
  %1142 = vmatprep.subr.bf16.mxu0 0
  %1143 = vmatpush1.bf16.msra.mxu0 0
  %1144 = vmatprep.subr.bf16.mxu0 0
  %1145 = vmatpush1.bf16.msra.mxu0 0
  %1146 = vmatprep.subr.bf16.mxu0 0
  %1147 = vmatpush1.bf16.msra.mxu0 0
  %1148 = vmatprep.subr.bf16.mxu0 0
  %1149 = vmatpush1.bf16.msra.mxu0 0
  %1150 = vmatprep.subr.bf16.mxu0 0
  %1151 = vmatpush1.bf16.msra.mxu0 0
  %1152 = vmatprep.subr.bf16.mxu0 0
  %1153 = vmatpush1.bf16.msra.mxu0 0
  %1154 = vmatprep.subr.bf16.mxu0 0
  %1155 = vmatpush1.bf16.msra.mxu0 0
  %1156 = vmatprep.subr.bf16.mxu0 0
  %1157 = vmatpush1.bf16.msra.mxu0 0
  %1158 = vmatprep.subr.bf16.mxu0 0
  %1159 = vmatpush1.bf16.msra.mxu0 0
  %1160 = vmatprep.subr.bf16.mxu0 0
  %1161 = vmatpush1.bf16.msra.mxu0 0
  %1162 = vmatprep.mubr.bf16.mxu0 0
  %1163 = vmatmul.mubr.bf16.gmra.mrb[0].mxu0 %v888
  %v1164 = vpop.f32.mrb[0].mxu0
  %v1165 = vadd.f32 %v880, %v1164
  %v1166 = vpop.f32.mrb[0].mxu0
  %v1167 = vadd.f32 %v880, %v1166
  %v1168 = vpop.f32.mrb[0].mxu0
  %v1169 = vpop.f32.mrb[0].mxu0
  %1170 = vdwg.mxu0
  %1171 = vmatprep.subr.bf16.mxu0 %v925
  %1172 = vmatpush1.bf16.msra.mxu0 %v922
  %1173 = vmatprep.subr.bf16.mxu0 0
  %1174 = vmatpush1.bf16.msra.mxu0 0
  %1175 = vmatprep.subr.bf16.mxu0 0
  %1176 = vmatpush1.bf16.msra.mxu0 0
  %1177 = vmatprep.subr.bf16.mxu0 0
  %1178 = vmatpush1.bf16.msra.mxu0 0
  %1179 = vmatprep.subr.bf16.mxu0 0
  %1180 = vmatpush1.bf16.msra.mxu0 0
  %1181 = vmatprep.subr.bf16.mxu0 0
  %1182 = vmatpush1.bf16.msra.mxu0 0
  %1183 = vmatprep.subr.bf16.mxu0 0
  %1184 = vmatpush1.bf16.msra.mxu0 0
  %1185 = vmatprep.subr.bf16.mxu0 0
  %1186 = vmatpush1.bf16.msra.mxu0 0
  %1187 = vmatprep.subr.bf16.mxu0 0
  %1188 = vmatpush1.bf16.msra.mxu0 0
  %1189 = vmatprep.subr.bf16.mxu0 0
  %1190 = vmatpush1.bf16.msra.mxu0 0
  %1191 = vmatprep.subr.bf16.mxu0 0
  %1192 = vmatpush1.bf16.msra.mxu0 0
  %1193 = vmatprep.subr.bf16.mxu0 0
  %1194 = vmatpush1.bf16.msra.mxu0 0
  %1195 = vmatprep.subr.bf16.mxu0 0
  %1196 = vmatpush1.bf16.msra.mxu0 0
  %1197 = vmatprep.subr.bf16.mxu0 0
  %1198 = vmatpush1.bf16.msra.mxu0 0
  %1199 = vmatprep.subr.bf16.mxu0 0
  %1200 = vmatpush1.bf16.msra.mxu0 0
  %1201 = vmatprep.subr.bf16.mxu0 0
  %1202 = vmatpush1.bf16.msra.mxu0 0
  %1203 = vmatprep.mubr.bf16.mxu0 0
  %1204 = vmatmul.mubr.bf16.gmra.mrb[0].mxu0 %v888
  %v1205 = vpop.f32.mrb[0].mxu0
  %v1206 = vadd.f32 %v880, %v1205
  %v1207 = vpop.f32.mrb[0].mxu0
  %v1208 = vadd.f32 %v880, %v1207
  %v1209 = vpop.f32.mrb[0].mxu0
  %v1210 = vpop.f32.mrb[0].mxu0
  %1211 = vdwg.mxu0
  %1212 = vmatprep.subr.bf16.mxu0 %v931
  %1213 = vmatpush1.bf16.msra.mxu0 %v928
  %1214 = vmatprep.subr.bf16.mxu0 0
  %1215 = vmatpush1.bf16.msra.mxu0 0
  %1216 = vmatprep.subr.bf16.mxu0 0
  %1217 = vmatpush1.bf16.msra.mxu0 0
  %1218 = vmatprep.subr.bf16.mxu0 0
  %1219 = vmatpush1.bf16.msra.mxu0 0
  %1220 = vmatprep.subr.bf16.mxu0 0
  %1221 = vmatpush1.bf16.msra.mxu0 0
  %1222 = vmatprep.subr.bf16.mxu0 0
  %1223 = vmatpush1.bf16.msra.mxu0 0
  %1224 = vmatprep.subr.bf16.mxu0 0
  %1225 = vmatpush1.bf16.msra.mxu0 0
  %1226 = vmatprep.subr.bf16.mxu0 0
  %1227 = vmatpush1.bf16.msra.mxu0 0
  %1228 = vmatprep.subr.bf16.mxu0 0
  %1229 = vmatpush1.bf16.msra.mxu0 0
  %1230 = vmatprep.subr.bf16.mxu0 0
  %1231 = vmatpush1.bf16.msra.mxu0 0
  %1232 = vmatprep.subr.bf16.mxu0 0
  %1233 = vmatpush1.bf16.msra.mxu0 0
  %1234 = vmatprep.subr.bf16.mxu0 0
  %1235 = vmatpush1.bf16.msra.mxu0 0
  %1236 = vmatprep.subr.bf16.mxu0 0
  %1237 = vmatpush1.bf16.msra.mxu0 0
  %1238 = vmatprep.subr.bf16.mxu0 0
  %1239 = vmatpush1.bf16.msra.mxu0 0
  %1240 = vmatprep.subr.bf16.mxu0 0
  %1241 = vmatpush1.bf16.msra.mxu0 0
  %1242 = vmatprep.subr.bf16.mxu0 0
  %1243 = vmatpush1.bf16.msra.mxu0 0
  %1244 = vmatprep.mubr.bf16.mxu0 0
  %1245 = vmatmul.mubr.bf16.gmra.mrb[0].mxu0 %v888
  %v1246 = vpop.f32.mrb[0].mxu0
  %v1247 = vadd.f32 %v880, %v1246
  %v1248 = vpop.f32.mrb[0].mxu0
  %v1249 = vadd.f32 %v880, %v1248
  %v1250 = vpop.f32.mrb[0].mxu0
  %v1251 = vpop.f32.mrb[0].mxu0
  %1252 = vdwg.mxu0
  %1253 = vmatprep.subr.bf16.mxu0 %v937
  %1254 = vmatpush1.bf16.msra.mxu0 %v934
  %1255 = vmatprep.subr.bf16.mxu0 0
  %1256 = vmatpush1.bf16.msra.mxu0 0
  %1257 = vmatprep.subr.bf16.mxu0 0
  %1258 = vmatpush1.bf16.msra.mxu0 0
  %1259 = vmatprep.subr.bf16.mxu0 0
  %1260 = vmatpush1.bf16.msra.mxu0 0
  %1261 = vmatprep.subr.bf16.mxu0 0
  %1262 = vmatpush1.bf16.msra.mxu0 0
  %1263 = vmatprep.subr.bf16.mxu0 0
  %1264 = vmatpush1.bf16.msra.mxu0 0
  %1265 = vmatprep.subr.bf16.mxu0 0
  %1266 = vmatpush1.bf16.msra.mxu0 0
  %1267 = vmatprep.subr.bf16.mxu0 0
  %1268 = vmatpush1.bf16.msra.mxu0 0
  %1269 = vmatprep.subr.bf16.mxu0 0
  %1270 = vmatpush1.bf16.msra.mxu0 0
  %1271 = vmatprep.subr.bf16.mxu0 0
  %1272 = vmatpush1.bf16.msra.mxu0 0
  %1273 = vmatprep.subr.bf16.mxu0 0
  %1274 = vmatpush1.bf16.msra.mxu0 0
  %1275 = vmatprep.subr.bf16.mxu0 0
  %1276 = vmatpush1.bf16.msra.mxu0 0
  %1277 = vmatprep.subr.bf16.mxu0 0
  %1278 = vmatpush1.bf16.msra.mxu0 0
  %1279 = vmatprep.subr.bf16.mxu0 0
  %1280 = vmatpush1.bf16.msra.mxu0 0
  %1281 = vmatprep.subr.bf16.mxu0 0
  %1282 = vmatpush1.bf16.msra.mxu0 0
  %1283 = vmatprep.subr.bf16.mxu0 0
  %1284 = vmatpush1.bf16.msra.mxu0 0
  %1285 = vmatprep.mubr.bf16.mxu0 0
  %1286 = vmatmul.mubr.bf16.gmra.mrb[0].mxu0 %v888
  %v1287 = vpop.f32.mrb[0].mxu0
  %v1288 = vadd.f32 %v880, %v1287
  %v1289 = vpop.f32.mrb[0].mxu0
  %v1290 = vadd.f32 %v880, %v1289
  %v1291 = vpop.f32.mrb[0].mxu0
  %v1292 = vpop.f32.mrb[0].mxu0
  %1293 = vdwg.mxu0
  %1294 = vmatprep.subr.bf16.mxu0 %v943
  %1295 = vmatpush1.bf16.msra.mxu0 %v940
  %1296 = vmatprep.subr.bf16.mxu0 0
  %1297 = vmatpush1.bf16.msra.mxu0 0
  %1298 = vmatprep.subr.bf16.mxu0 0
  %1299 = vmatpush1.bf16.msra.mxu0 0
  %1300 = vmatprep.subr.bf16.mxu0 0
  %1301 = vmatpush1.bf16.msra.mxu0 0
  %1302 = vmatprep.subr.bf16.mxu0 0
  %1303 = vmatpush1.bf16.msra.mxu0 0
  %1304 = vmatprep.subr.bf16.mxu0 0
  %1305 = vmatpush1.bf16.msra.mxu0 0
  %1306 = vmatprep.subr.bf16.mxu0 0
  %1307 = vmatpush1.bf16.msra.mxu0 0
  %1308 = vmatprep.subr.bf16.mxu0 0
  %1309 = vmatpush1.bf16.msra.mxu0 0
  %1310 = vmatprep.subr.bf16.mxu0 0
  %1311 = vmatpush1.bf16.msra.mxu0 0
  %1312 = vmatprep.subr.bf16.mxu0 0
  %1313 = vmatpush1.bf16.msra.mxu0 0
  %1314 = vmatprep.subr.bf16.mxu0 0
  %1315 = vmatpush1.bf16.msra.mxu0 0
  %1316 = vmatprep.subr.bf16.mxu0 0
  %1317 = vmatpush1.bf16.msra.mxu0 0
  %1318 = vmatprep.subr.bf16.mxu0 0
  %1319 = vmatpush1.bf16.msra.mxu0 0
  %1320 = vmatprep.subr.bf16.mxu0 0
  %1321 = vmatpush1.bf16.msra.mxu0 0
  %1322 = vmatprep.subr.bf16.mxu0 0
  %1323 = vmatpush1.bf16.msra.mxu0 0
  %1324 = vmatprep.subr.bf16.mxu0 0
  %1325 = vmatpush1.bf16.msra.mxu0 0
  %1326 = vmatprep.mubr.bf16.mxu0 0
  %1327 = vmatmul.mubr.bf16.gmra.mrb[0].mxu0 %v888
  %v1328 = vpop.f32.mrb[0].mxu0
  %v1329 = vadd.f32 %v880, %v1328
  %v1330 = vpop.f32.mrb[0].mxu0
  %v1331 = vadd.f32 %v880, %v1330
  %v1332 = vpop.f32.mrb[0].mxu0
  %v1333 = vpop.f32.mrb[0].mxu0
  %1334 = vdwg.mxu0
  %1335 = vmatprep.subr.bf16.mxu0 %v949
  %1336 = vmatpush1.bf16.msra.mxu0 %v946
  %1337 = vmatprep.subr.bf16.mxu0 0
  %1338 = vmatpush1.bf16.msra.mxu0 0
  %1339 = vmatprep.subr.bf16.mxu0 0
  %1340 = vmatpush1.bf16.msra.mxu0 0
  %1341 = vmatprep.subr.bf16.mxu0 0
  %1342 = vmatpush1.bf16.msra.mxu0 0
  %1343 = vmatprep.subr.bf16.mxu0 0
  %1344 = vmatpush1.bf16.msra.mxu0 0
  %1345 = vmatprep.subr.bf16.mxu0 0
  %1346 = vmatpush1.bf16.msra.mxu0 0
  %1347 = vmatprep.subr.bf16.mxu0 0
  %1348 = vmatpush1.bf16.msra.mxu0 0
  %1349 = vmatprep.subr.bf16.mxu0 0
  %1350 = vmatpush1.bf16.msra.mxu0 0
  %1351 = vmatprep.subr.bf16.mxu0 0
  %1352 = vmatpush1.bf16.msra.mxu0 0
  %1353 = vmatprep.subr.bf16.mxu0 0
  %1354 = vmatpush1.bf16.msra.mxu0 0
  %1355 = vmatprep.subr.bf16.mxu0 0
  %1356 = vmatpush1.bf16.msra.mxu0 0
  %1357 = vmatprep.subr.bf16.mxu0 0
  %1358 = vmatpush1.bf16.msra.mxu0 0
  %1359 = vmatprep.subr.bf16.mxu0 0
  %1360 = vmatpush1.bf16.msra.mxu0 0
  %1361 = vmatprep.subr.bf16.mxu0 0
  %1362 = vmatpush1.bf16.msra.mxu0 0
  %1363 = vmatprep.subr.bf16.mxu0 0
  %1364 = vmatpush1.bf16.msra.mxu0 0
  %1365 = vmatprep.subr.bf16.mxu0 0
  %1366 = vmatpush1.bf16.msra.mxu0 0
  %1367 = vmatprep.mubr.bf16.mxu0 0
  %1368 = vmatmul.mubr.bf16.gmra.mrb[0].mxu0 %v888
  %v1369 = vpop.f32.mrb[0].mxu0
  %v1370 = vadd.f32 %v880, %v1369
  %v1371 = vpop.f32.mrb[0].mxu0
  %v1372 = vadd.f32 %v880, %v1371
  %v1373 = vpop.f32.mrb[0].mxu0
  %v1374 = vpop.f32.mrb[0].mxu0
  %1375 = vdwg.mxu0
  %1376 = vmatprep.subr.bf16.mxu0 %v955
  %1377 = vmatpush1.bf16.msra.mxu0 %v952
  %1378 = vmatprep.subr.bf16.mxu0 0
  %1379 = vmatpush1.bf16.msra.mxu0 0
  %1380 = vmatprep.subr.bf16.mxu0 0
  %1381 = vmatpush1.bf16.msra.mxu0 0
  %1382 = vmatprep.subr.bf16.mxu0 0
  %1383 = vmatpush1.bf16.msra.mxu0 0
  %1384 = vmatprep.subr.bf16.mxu0 0
  %1385 = vmatpush1.bf16.msra.mxu0 0
  %1386 = vmatprep.subr.bf16.mxu0 0
  %1387 = vmatpush1.bf16.msra.mxu0 0
  %1388 = vmatprep.subr.bf16.mxu0 0
  %1389 = vmatpush1.bf16.msra.mxu0 0
  %1390 = vmatprep.subr.bf16.mxu0 0
  %1391 = vmatpush1.bf16.msra.mxu0 0
  %1392 = vmatprep.subr.bf16.mxu0 0
  %1393 = vmatpush1.bf16.msra.mxu0 0
  %1394 = vmatprep.subr.bf16.mxu0 0
  %1395 = vmatpush1.bf16.msra.mxu0 0
  %1396 = vmatprep.subr.bf16.mxu0 0
  %1397 = vmatpush1.bf16.msra.mxu0 0
  %1398 = vmatprep.subr.bf16.mxu0 0
  %1399 = vmatpush1.bf16.msra.mxu0 0
  %1400 = vmatprep.subr.bf16.mxu0 0
  %1401 = vmatpush1.bf16.msra.mxu0 0
  %1402 = vmatprep.subr.bf16.mxu0 0
  %1403 = vmatpush1.bf16.msra.mxu0 0
  %1404 = vmatprep.subr.bf16.mxu0 0
  %1405 = vmatpush1.bf16.msra.mxu0 0
  %1406 = vmatprep.subr.bf16.mxu0 0
  %1407 = vmatpush1.bf16.msra.mxu0 0
  %1408 = vmatprep.mubr.bf16.mxu0 0
  %1409 = vmatmul.mubr.bf16.gmra.mrb[0].mxu0 %v888
  %v1410 = vpop.f32.mrb[0].mxu0
  %v1411 = vadd.f32 %v880, %v1410
  %v1412 = vpop.f32.mrb[0].mxu0
  %v1413 = vadd.f32 %v880, %v1412
  %v1414 = vpop.f32.mrb[0].mxu0
  %v1415 = vpop.f32.mrb[0].mxu0
  %1416 = vdwg.mxu0
  %1417 = vmatprep.subr.bf16.mxu0 %v961
  %1418 = vmatpush1.bf16.msra.mxu0 %v958
  %1419 = vmatprep.subr.bf16.mxu0 0
  %1420 = vmatpush1.bf16.msra.mxu0 0
  %1421 = vmatprep.subr.bf16.mxu0 0
  %1422 = vmatpush1.bf16.msra.mxu0 0
  %1423 = vmatprep.subr.bf16.mxu0 0
  %1424 = vmatpush1.bf16.msra.mxu0 0
  %1425 = vmatprep.subr.bf16.mxu0 0
  %1426 = vmatpush1.bf16.msra.mxu0 0
  %1427 = vmatprep.subr.bf16.mxu0 0
  %1428 = vmatpush1.bf16.msra.mxu0 0
  %1429 = vmatprep.subr.bf16.mxu0 0
  %1430 = vmatpush1.bf16.msra.mxu0 0
  %1431 = vmatprep.subr.bf16.mxu0 0
  %1432 = vmatpush1.bf16.msra.mxu0 0
  %1433 = vmatprep.subr.bf16.mxu0 0
  %1434 = vmatpush1.bf16.msra.mxu0 0
  %1435 = vmatprep.subr.bf16.mxu0 0
  %1436 = vmatpush1.bf16.msra.mxu0 0
  %1437 = vmatprep.subr.bf16.mxu0 0
  %1438 = vmatpush1.bf16.msra.mxu0 0
  %1439 = vmatprep.subr.bf16.mxu0 0
  %1440 = vmatpush1.bf16.msra.mxu0 0
  %1441 = vmatprep.subr.bf16.mxu0 0
  %1442 = vmatpush1.bf16.msra.mxu0 0
  %1443 = vmatprep.subr.bf16.mxu0 0
  %1444 = vmatpush1.bf16.msra.mxu0 0
  %1445 = vmatprep.subr.bf16.mxu0 0
  %1446 = vmatpush1.bf16.msra.mxu0 0
  %1447 = vmatprep.subr.bf16.mxu0 0
  %1448 = vmatpush1.bf16.msra.mxu0 0
  %1449 = vmatprep.mubr.bf16.mxu0 0
  %1450 = vmatmul.mubr.bf16.gmra.mrb[0].mxu0 %v888
  %v1451 = vpop.f32.mrb[0].mxu0
  %v1452 = vadd.f32 %v880, %v1451
  %v1453 = vpop.f32.mrb[0].mxu0
  %v1454 = vadd.f32 %v880, %v1453
  %v1455 = vpop.f32.mrb[0].mxu0
  %v1456 = vpop.f32.mrb[0].mxu0
  %1457 = vdwg.mxu0
  %1458 = vmatprep.subr.bf16.mxu0 0
  %1459 = vmatpush1.bf16.msra.mxu0 %v964
  %1460 = vmatprep.subr.bf16.mxu0 0
  %1461 = vmatpush1.bf16.msra.mxu0 0
  %1462 = vmatprep.subr.bf16.mxu0 0
  %1463 = vmatpush1.bf16.msra.mxu0 0
  %1464 = vmatprep.subr.bf16.mxu0 0
  %1465 = vmatpush1.bf16.msra.mxu0 0
  %1466 = vmatprep.subr.bf16.mxu0 0
  %1467 = vmatpush1.bf16.msra.mxu0 0
  %1468 = vmatprep.subr.bf16.mxu0 0
  %1469 = vmatpush1.bf16.msra.mxu0 0
  %1470 = vmatprep.subr.bf16.mxu0 0
  %1471 = vmatpush1.bf16.msra.mxu0 0
  %1472 = vmatprep.subr.bf16.mxu0 0
  %1473 = vmatpush1.bf16.msra.mxu0 0
  %1474 = vmatprep.subr.bf16.mxu0 0
  %1475 = vmatpush1.bf16.msra.mxu0 0
  %1476 = vmatprep.subr.bf16.mxu0 0
  %1477 = vmatpush1.bf16.msra.mxu0 0
  %1478 = vmatprep.subr.bf16.mxu0 0
  %1479 = vmatpush1.bf16.msra.mxu0 0
  %1480 = vmatprep.subr.bf16.mxu0 0
  %1481 = vmatpush1.bf16.msra.mxu0 0
  %1482 = vmatprep.subr.bf16.mxu0 0
  %1483 = vmatpush1.bf16.msra.mxu0 0
  %1484 = vmatprep.subr.bf16.mxu0 0
  %1485 = vmatpush1.bf16.msra.mxu0 0
  %1486 = vmatprep.subr.bf16.mxu0 0
  %1487 = vmatpush1.bf16.msra.mxu0 0
  %1488 = vmatprep.subr.bf16.mxu0 0
  %1489 = vmatpush1.bf16.msra.mxu0 0
  %1490 = vmatprep.mubr.bf16.mxu0 0
  %1491 = vmatmul.mubr.bf16.gmra.mrb[0].mxu0 %v888
  %v1492 = vpop.f32.mrb[0].mxu0
  %v1493 = vpop.f32.mrb[0].mxu0
  %v1494 = vpop.f32.mrb[0].mxu0
  %v1495 = vadd.f32 %v885, %v1494
  %v1496 = vpop.f32.mrb[0].mxu0
  %1497 = vdwg.mxu0
  %1499 = vset.pattern.permute.xlu0 0
  %1500 = vperm.xlu0 %1499, %v1495
  %v1501 = vpop.permute.xlu0 %1500
  %v1503 = vadd.f32 %v1001, %v1501
  %v1504 = vadd.f32 %v1003, %v1501
  %v1505 = vxor.u32 %v1503, 2147483648
  %v1506 = vxor.u32 %v1504, 2147483648
  %v1507 = vmul.f32 %v1505, 1.442695
  %v1508 = vpow.pop %v1507
  %v1509 = vmul.f32 %v1506, 1.442695
  %v1510 = vpow.pop %v1509
  %v1511 = vadd.f32 %v1508, 1.0
  %v1512 = vadd.f32 %v1510, 1.0
  %v1513 = vrcp.pop %v1511
  %v1514 = vmul.f32 1.0, %v1513
  %v1515 = vrcp.pop %v1512
  %v1516 = vmul.f32 1.0, %v1515
  %v1517 = vld [vmem:[#allocation2] sm:$0xff]
  %v1518 = vld [vmem:[#allocation2 + $0x8] sm:$0xff]
  %v1519 = vmul.f32 %v1517, %v1514
  %v1520 = vmul.f32 %v1518, %v1516
  %v1521 = vmul.f32 %v1519, %v21
  %v1522 = vmul.f32 %v1520, %v22
  %v1523 = vmul.f32 %v1519, %v15
  %v1524 = vmul.f32 %v1520, %v16
  %1525 = vset.pattern.permute.xlu0 1
  %1526 = vperm.xlu0 %1525, %v1495
  %v1527 = vpop.permute.xlu0 %1526
  %v1529 = vadd.f32 %v1042, %v1527
  %v1530 = vadd.f32 %v1044, %v1527
  %v1531 = vxor.u32 %v1529, 2147483648
  %v1532 = vxor.u32 %v1530, 2147483648
  %v1533 = vmul.f32 %v1531, 1.442695
  %v1534 = vpow.pop %v1533
  %v1535 = vmul.f32 %v1532, 1.442695
  %v1536 = vpow.pop %v1535
  %v1537 = vadd.f32 %v1534, 1.0
  %v1538 = vadd.f32 %v1536, 1.0
  %v1539 = vrcp.pop %v1537
  %v1540 = vmul.f32 1.0, %v1539
  %v1541 = vrcp.pop %v1538
  %v1542 = vmul.f32 1.0, %v1541
  %v1543 = vld [vmem:[#allocation2 + $0x10] sm:$0xff]
  %v1544 = vld [vmem:[#allocation2 + $0x18] sm:$0xff]
  %v1545 = vmul.f32 %v1543, %v1540
  %v1546 = vmul.f32 %v1544, %v1542
  %v1547 = vmul.f32 %v1545, %v24
  %v1548 = vmul.f32 %v1546, %v25
  %v1549 = vmul.f32 %v1545, %v18
  %v1550 = vmul.f32 %v1546, %v19
  %1551 = vset.pattern.permute.xlu0 2
  %1552 = vperm.xlu0 %1551, %v1495
  %v1553 = vpop.permute.xlu0 %1552
  %v1555 = vadd.f32 %v1083, %v1553
  %v1556 = vadd.f32 %v1085, %v1553
  %v1557 = vxor.u32 %v1555, 2147483648
  %v1558 = vxor.u32 %v1556, 2147483648
  %v1559 = vmul.f32 %v1557, 1.442695
  %v1560 = vpow.pop %v1559
  %v1561 = vmul.f32 %v1558, 1.442695
  %v1562 = vpow.pop %v1561
  %v1563 = vadd.f32 %v1560, 1.0
  %v1564 = vadd.f32 %v1562, 1.0
  %v1565 = vrcp.pop %v1563
  %v1566 = vmul.f32 1.0, %v1565
  %v1567 = vrcp.pop %v1564
  %v1568 = vmul.f32 1.0, %v1567
  %v1569 = vld [vmem:[#allocation2 + $0x20] sm:$0xff]
  %v1570 = vld [vmem:[#allocation2 + $0x28] sm:$0xff]
  %v1571 = vmul.f32 %v1569, %v1566
  %v1572 = vmul.f32 %v1570, %v1568
  %v1573 = vmul.f32 %v1571, %v27
  %v1574 = vmul.f32 %v1572, %v28
  %v1575 = vmul.f32 %v1571, %v15
  %v1576 = vmul.f32 %v1572, %v16
  %v1577 = vadd.f32 %v1521, %v1573
  %v1578 = vadd.f32 %v1522, %v1574
  %1579 = vset.pattern.permute.xlu0 3
  %1580 = vperm.xlu0 %1579, %v1495
  %v1581 = vpop.permute.xlu0 %1580
  %v1583 = vadd.f32 %v1124, %v1581
  %v1584 = vadd.f32 %v1126, %v1581
  %v1585 = vxor.u32 %v1583, 2147483648
  %v1586 = vxor.u32 %v1584, 2147483648
  %v1587 = vmul.f32 %v1585, 1.442695
  %v1588 = vpow.pop %v1587
  %v1589 = vmul.f32 %v1586, 1.442695
  %v1590 = vpow.pop %v1589
  %v1591 = vadd.f32 %v1588, 1.0
  %v1592 = vadd.f32 %v1590, 1.0
  %v1593 = vrcp.pop %v1591
  %v1594 = vmul.f32 1.0, %v1593
  %v1595 = vrcp.pop %v1592
  %v1596 = vmul.f32 1.0, %v1595
  %v1597 = vld [vmem:[#allocation2 + $0x30] sm:$0xff]
  %v1598 = vld [vmem:[#allocation2 + $0x38] sm:$0xff]
  %v1599 = vmul.f32 %v1597, %v1594
  %v1600 = vmul.f32 %v1598, %v1596
  %v1601 = vmul.f32 %v1599, %v30
  %v1602 = vmul.f32 %v1600, %v31
  %v1603 = vmul.f32 %v1599, %v18
  %v1604 = vmul.f32 %v1600, %v19
  %v1605 = vadd.f32 %v1547, %v1601
  %v1606 = vadd.f32 %v1548, %v1602
  %1607 = vset.pattern.permute.xlu0 4
  %1608 = vperm.xlu0 %1607, %v1495
  %v1609 = vpop.permute.xlu0 %1608
  %v1611 = vadd.f32 %v1165, %v1609
  %v1612 = vadd.f32 %v1167, %v1609
  %v1613 = vxor.u32 %v1611, 2147483648
  %v1614 = vxor.u32 %v1612, 2147483648
  %v1615 = vmul.f32 %v1613, 1.442695
  %v1616 = vpow.pop %v1615
  %v1617 = vmul.f32 %v1614, 1.442695
  %v1618 = vpow.pop %v1617
  %v1619 = vadd.f32 %v1616, 1.0
  %v1620 = vadd.f32 %v1618, 1.0
  %v1621 = vrcp.pop %v1619
  %v1622 = vmul.f32 1.0, %v1621
  %v1623 = vrcp.pop %v1620
  %v1624 = vmul.f32 1.0, %v1623
  %v1625 = vld [vmem:[#allocation2 + $0x40] sm:$0xff]
  %v1626 = vld [vmem:[#allocation2 + $0x48] sm:$0xff]
  %v1627 = vmul.f32 %v1625, %v1622
  %v1628 = vmul.f32 %v1626, %v1624
  %v1629 = vmul.f32 %v1627, %v33
  %v1630 = vmul.f32 %v1628, %v34
  %v1631 = vmul.f32 %v1627, %v15
  %v1632 = vmul.f32 %v1628, %v16
  %v1633 = vadd.f32 %v1577, %v1629
  %v1634 = vadd.f32 %v1578, %v1630
  %1635 = vset.pattern.permute.xlu0 5
  %1636 = vperm.xlu0 %1635, %v1495
  %v1637 = vpop.permute.xlu0 %1636
  %v1639 = vadd.f32 %v1206, %v1637
  %v1640 = vadd.f32 %v1208, %v1637
  %v1641 = vxor.u32 %v1639, 2147483648
  %v1642 = vxor.u32 %v1640, 2147483648
  %v1643 = vmul.f32 %v1641, 1.442695
  %v1644 = vpow.pop %v1643
  %v1645 = vmul.f32 %v1642, 1.442695
  %v1646 = vpow.pop %v1645
  %v1647 = vadd.f32 %v1644, 1.0
  %v1648 = vadd.f32 %v1646, 1.0
  %v1649 = vrcp.pop %v1647
  %v1650 = vmul.f32 1.0, %v1649
  %v1651 = vrcp.pop %v1648
  %v1652 = vmul.f32 1.0, %v1651
  %v1653 = vld [vmem:[#allocation2 + $0x50] sm:$0xff]
  %v1654 = vld [vmem:[#allocation2 + $0x58] sm:$0xff]
  %v1655 = vmul.f32 %v1653, %v1650
  %v1656 = vmul.f32 %v1654, %v1652
  %v1657 = vmul.f32 %v1655, %v36
  %v1658 = vmul.f32 %v1656, %v37
  %v1659 = vmul.f32 %v1655, %v18
  %v1660 = vmul.f32 %v1656, %v19
  %v1661 = vadd.f32 %v1605, %v1657
  %v1662 = vadd.f32 %v1606, %v1658
  %1663 = vset.pattern.permute.xlu0 6
  %1664 = vperm.xlu0 %1663, %v1495
  %v1665 = vpop.permute.xlu0 %1664
  %v1667 = vadd.f32 %v1247, %v1665
  %v1668 = vadd.f32 %v1249, %v1665
  %v1669 = vxor.u32 %v1667, 2147483648
  %v1670 = vxor.u32 %v1668, 2147483648
  %v1671 = vmul.f32 %v1669, 1.442695
  %v1672 = vpow.pop %v1671
  %v1673 = vmul.f32 %v1670, 1.442695
  %v1674 = vpow.pop %v1673
  %v1675 = vadd.f32 %v1672, 1.0
  %v1676 = vadd.f32 %v1674, 1.0
  %v1677 = vrcp.pop %v1675
  %v1678 = vmul.f32 1.0, %v1677
  %v1679 = vrcp.pop %v1676
  %v1680 = vmul.f32 1.0, %v1679
  %v1681 = vld [vmem:[#allocation2 + $0x60] sm:$0xff]
  %v1682 = vld [vmem:[#allocation2 + $0x68] sm:$0xff]
  %v1683 = vmul.f32 %v1681, %v1678
  %v1684 = vmul.f32 %v1682, %v1680
  %v1685 = vmul.f32 %v1683, %v27
  %v1686 = vmul.f32 %v1684, %v28
  %v1687 = vmul.f32 %v1683, %v21
  %v1688 = vmul.f32 %v1684, %v22
  %v1689 = vadd.f32 %v1523, %v1685
  %v1690 = vadd.f32 %v1524, %v1686
  %v1691 = vadd.f32 %v1575, %v1687
  %v1692 = vadd.f32 %v1576, %v1688
  %1693 = vset.pattern.permute.xlu0 7
  %1694 = vperm.xlu0 %1693, %v1495
  %v1695 = vpop.permute.xlu0 %1694
  %v1697 = vadd.f32 %v1288, %v1695
  %v1698 = vadd.f32 %v1290, %v1695
  %v1699 = vxor.u32 %v1697, 2147483648
  %v1700 = vxor.u32 %v1698, 2147483648
  %v1701 = vmul.f32 %v1699, 1.442695
  %v1702 = vpow.pop %v1701
  %v1703 = vmul.f32 %v1700, 1.442695
  %v1704 = vpow.pop %v1703
  %v1705 = vadd.f32 %v1702, 1.0
  %v1706 = vadd.f32 %v1704, 1.0
  %v1707 = vrcp.pop %v1705
  %v1708 = vmul.f32 1.0, %v1707
  %v1709 = vrcp.pop %v1706
  %v1710 = vmul.f32 1.0, %v1709
  %v1711 = vld [vmem:[#allocation2 + $0x70] sm:$0xff]
  %v1712 = vld [vmem:[#allocation2 + $0x78] sm:$0xff]
  %v1713 = vmul.f32 %v1711, %v1708
  %v1714 = vmul.f32 %v1712, %v1710
  %v1715 = vmul.f32 %v1713, %v30
  %v1716 = vmul.f32 %v1714, %v31
  %v1717 = vmul.f32 %v1713, %v24
  %v1718 = vmul.f32 %v1714, %v25
  %v1719 = vadd.f32 %v1549, %v1715
  %v1720 = vadd.f32 %v1550, %v1716
  %v1721 = vadd.f32 %v1603, %v1717
  %v1722 = vadd.f32 %v1604, %v1718
  %1723 = vset.pattern.permute.xlu0 8
  %1724 = vperm.xlu0 %1723, %v1495
  %v1725 = vpop.permute.xlu0 %1724
  %v1727 = vadd.f32 %v1329, %v1725
  %v1728 = vadd.f32 %v1331, %v1725
  %v1729 = vxor.u32 %v1727, 2147483648
  %v1730 = vxor.u32 %v1728, 2147483648
  %v1731 = vmul.f32 %v1729, 1.442695
  %v1732 = vpow.pop %v1731
  %v1733 = vmul.f32 %v1730, 1.442695
  %v1734 = vpow.pop %v1733
  %v1735 = vadd.f32 %v1732, 1.0
  %v1736 = vadd.f32 %v1734, 1.0
  %v1737 = vrcp.pop %v1735
  %v1738 = vmul.f32 1.0, %v1737
  %v1739 = vrcp.pop %v1736
  %v1740 = vmul.f32 1.0, %v1739
  %v1741 = vld [vmem:[#allocation2 + $0x80] sm:$0xff]
  %v1742 = vld [vmem:[#allocation2 + $0x88] sm:$0xff]
  %v1743 = vmul.f32 %v1741, %v1738
  %v1744 = vmul.f32 %v1742, %v1740
  %v1745 = vmul.f32 %v1743, %v33
  %v1746 = vmul.f32 %v1744, %v34
  %v1747 = vmul.f32 %v1743, %v21
  %v1748 = vmul.f32 %v1744, %v22
  %v1749 = vadd.f32 %v1689, %v1745
  %v1750 = vadd.f32 %v1690, %v1746
  %v1751 = vadd.f32 %v1631, %v1747
  %v1752 = vadd.f32 %v1632, %v1748
  %1753 = vset.pattern.permute.xlu0 9
  %1754 = vperm.xlu0 %1753, %v1495
  %v1755 = vpop.permute.xlu0 %1754
  %v1757 = vadd.f32 %v1370, %v1755
  %v1758 = vadd.f32 %v1372, %v1755
  %v1759 = vxor.u32 %v1757, 2147483648
  %v1760 = vxor.u32 %v1758, 2147483648
  %v1761 = vmul.f32 %v1759, 1.442695
  %v1762 = vpow.pop %v1761
  %v1763 = vmul.f32 %v1760, 1.442695
  %v1764 = vpow.pop %v1763
  %v1765 = vadd.f32 %v1762, 1.0
  %v1766 = vadd.f32 %v1764, 1.0
  %v1767 = vrcp.pop %v1765
  %v1768 = vmul.f32 1.0, %v1767
  %v1769 = vrcp.pop %v1766
  %v1770 = vmul.f32 1.0, %v1769
  %v1771 = vld [vmem:[#allocation2 + $0x90] sm:$0xff]
  %v1772 = vld [vmem:[#allocation2 + $0x98] sm:$0xff]
  %v1773 = vmul.f32 %v1771, %v1768
  %v1774 = vmul.f32 %v1772, %v1770
  %v1775 = vmul.f32 %v1773, %v36
  %v1776 = vmul.f32 %v1774, %v37
  %v1777 = vmul.f32 %v1773, %v24
  %v1778 = vmul.f32 %v1774, %v25
  %v1779 = vadd.f32 %v1719, %v1775
  %v1780 = vadd.f32 %v1720, %v1776
  %v1781 = vadd.f32 %v1659, %v1777
  %v1782 = vadd.f32 %v1660, %v1778
  %1783 = vset.pattern.permute.xlu0 10
  %1784 = vperm.xlu0 %1783, %v1495
  %v1785 = vpop.permute.xlu0 %1784
  %v1787 = vadd.f32 %v1411, %v1785
  %v1788 = vadd.f32 %v1413, %v1785
  %v1789 = vxor.u32 %v1787, 2147483648
  %v1790 = vxor.u32 %v1788, 2147483648
  %v1791 = vmul.f32 %v1789, 1.442695
  %v1792 = vpow.pop %v1791
  %v1793 = vmul.f32 %v1790, 1.442695
  %v1794 = vpow.pop %v1793
  %v1795 = vadd.f32 %v1792, 1.0
  %v1796 = vadd.f32 %v1794, 1.0
  %v1797 = vrcp.pop %v1795
  %v1798 = vmul.f32 1.0, %v1797
  %v1799 = vrcp.pop %v1796
  %v1800 = vmul.f32 1.0, %v1799
  %v1801 = vld [vmem:[#allocation2 + $0xa0] sm:$0xff]
  %v1802 = vld [vmem:[#allocation2 + $0xa8] sm:$0xff]
  %v1803 = vmul.f32 %v1801, %v1798
  %v1804 = vmul.f32 %v1802, %v1800
  %v1805 = vmul.f32 %v1803, %v33
  %v1806 = vmul.f32 %v1804, %v34
  %v1807 = vmul.f32 %v1803, %v27
  %v1808 = vmul.f32 %v1804, %v28
  %v1809 = vadd.f32 %v1691, %v1805
  %v1810 = vadd.f32 %v1692, %v1806
  %v1811 = vadd.f32 %v1751, %v1807
  %v1812 = vadd.f32 %v1752, %v1808
  %1813 = vset.pattern.permute.xlu0 11
  %1814 = vperm.xlu0 %1813, %v1495
  %v1815 = vpop.permute.xlu0 %1814
  %v1817 = vadd.f32 %v1452, %v1815
  %v1818 = vadd.f32 %v1454, %v1815
  %v1819 = vxor.u32 %v1817, 2147483648
  %v1820 = vxor.u32 %v1818, 2147483648
  %v1821 = vmul.f32 %v1819, 1.442695
  %v1822 = vpow.pop %v1821
  %v1823 = vmul.f32 %v1820, 1.442695
  %v1824 = vpow.pop %v1823
  %v1825 = vadd.f32 %v1822, 1.0
  %v1826 = vadd.f32 %v1824, 1.0
  %v1827 = vrcp.pop %v1825
  %v1828 = vmul.f32 1.0, %v1827
  %v1829 = vrcp.pop %v1826
  %v1830 = vmul.f32 1.0, %v1829
  %v1831 = vld [vmem:[#allocation2 + $0xb0] sm:$0xff]
  %v1832 = vld [vmem:[#allocation2 + $0xb8] sm:$0xff]
  %v1833 = vmul.f32 %v1831, %v1828
  %v1834 = vmul.f32 %v1832, %v1830
  %v1835 = vmul.f32 %v1833, %v36
  %v1836 = vmul.f32 %v1834, %v37
  %v1837 = vmul.f32 %v1833, %v30
  %v1838 = vmul.f32 %v1834, %v31
  %v1839 = vadd.f32 %v1721, %v1835
  %v1840 = vadd.f32 %v1722, %v1836
  %v1841 = vadd.f32 %v1781, %v1837
  %v1842 = vadd.f32 %v1782, %v1838
  %1843 = vst [vmem:[%s3] sm:$0xff] %v1633
  %1844 = vst [vmem:[%s3 + $0x8] sm:$0xff] %v1634
  %s1845 = scalar_lea.vmem %s3, 16
  %1846 = vst [vmem:[%s1845] sm:$0xff] %v1661
  %1847 = vst [vmem:[%s1845 + $0x8] sm:$0xff] %v1662
  %s1848 = scalar_lea.vmem %s3, 32
  %1849 = vst [vmem:[%s1848] sm:$0xff] %v1749
  %1850 = vst [vmem:[%s1848 + $0x8] sm:$0xff] %v1750
  %s1851 = scalar_lea.vmem %s3, 48
  %1852 = vst [vmem:[%s1851] sm:$0xff] %v1779
  %1853 = vst [vmem:[%s1851 + $0x8] sm:$0xff] %v1780
  %s1854 = scalar_lea.vmem %s3, 64
  %1855 = vst [vmem:[%s1854] sm:$0xff] %v1809
  %1856 = vst [vmem:[%s1854 + $0x8] sm:$0xff] %v1810
  %s1857 = scalar_lea.vmem %s3, 80
  %1858 = vst [vmem:[%s1857] sm:$0xff] %v1839
  %1859 = vst [vmem:[%s1857 + $0x8] sm:$0xff] %v1840
  %s1860 = scalar_lea.vmem %s3, 96
  %1861 = vst [vmem:[%s1860] sm:$0xff] %v1811
  %1862 = vst [vmem:[%s1860 + $0x8] sm:$0xff] %v1812
  %s1863 = scalar_lea.vmem %s3, 112
  %1864 = vst [vmem:[%s1863] sm:$0xff] %v1841
  %1865 = vst [vmem:[%s1863 + $0x8] sm:$0xff] %v1842
  // Predicated region
  $region14: #{fub_forward.1} parent=0 // pred_check
    _
  $region15: #{fub_forward.1} parent=0 // pred_check_branch
    %1867 = sbr.rel (0) target = $region17
  $region16: #{fub_forward.1} parent=0 // pred_region
    _
  $region17: #{fub_forward.1} parent=0 // pred_fallthru
    _
  // Predicated region
  $region18: #{fub_forward.1} parent=0 // pred_check
    _
  $region19: #{fub_forward.1} parent=0 // pred_check_branch
    %1869 = sbr.rel (0) target = $region21
  $region20: #{fub_forward.1} parent=0 // pred_region
    _
  $region21: #{fub_forward.1} parent=0 // pred_fallthru
    _

</llo_original>
